<compile_context>
chip_gen: v6e
topology: v6e:2x2x1
jax: 0.10.0
libtpu: 0.0.40
codegen_flags: <defaults>
</compile_context>

<pallas_src>
import functools

import jax
import jax.numpy as jnp
from jax import lax
from jax.experimental import pallas as pl
from jax.experimental.pallas import tpu as pltpu


# ----------------------------- Pallas kernel ------------------------------- #

def _bottleneck_kernel(xm_ref, xt_ref, xb_ref, w1_ref, b1_ref, w2_ref, b2_ref,
                       w3_ref, b3_ref, o_ref, *, tile_h, width, n_row_blocks):
    """Fused 1x1 -> 3x3 -> 1x1 bottleneck on TILE_H image rows (+1-row halo).

    xm_ref : (tile_h, W, Cin)  bf16  main rows of image n
    xt_ref : (1, W, Cin)       bf16  row above the tile (garbage if j == 0)
    xb_ref : (1, W, Cin)       bf16  row below the tile (garbage if j == last)
    w*_ref : bf16 weights with the BN scale pre-folded in
             (w1: (Cin,Cmid), w2: (9*Cmid,Cmid) dense 2-D, w3: (Cmid,Cout))
    b*_ref : (1, C) f32 folded BN biases
    o_ref  : (tile_h*W, Cout)  bf16  dense interior-only output rows
    """
    j = pl.program_id(1)
    cin = xm_ref.shape[-1]
    cmid = w1_ref.shape[-1]

    x_main = xm_ref[...]                                    # (tile_h, W, Cin)
    x_ext = jnp.concatenate([xt_ref[...], x_main, xb_ref[...]], axis=0)

    # conv1 (1x1) + bn1 + relu over main rows + 1-row halo on each side.
    rows_ext = (tile_h + 2) * width
    h1 = jnp.dot(x_ext.reshape(rows_ext, cin), w1_ref[...],
                 preferred_element_type=jnp.float32)
    h1 = jnp.maximum(h1 + b1_ref[...], 0.0)
    h1 = h1.reshape(tile_h + 2, width, cmid)

    # Zero the halo rows that correspond to conv2's zero padding at the image
    # top/bottom edges (only the first / last row-block actually pads).
    r = lax.broadcasted_iota(jnp.int32, (tile_h + 2, 1, 1), 0)
    keep = jnp.logical_and(
        jnp.logical_or(r != 0, j > 0),
        jnp.logical_or(r != tile_h + 1, j < n_row_blocks - 1))
    h1 = jnp.where(keep, h1, 0.0).astype(jnp.bfloat16)

    # Column zero-halo (conv2 padding=1 along W), built entirely in VMEM.
    zcol = jnp.zeros((tile_h + 2, 1, cmid), jnp.bfloat16)
    h1p = jnp.concatenate([zcol, h1, zcol], axis=1)         # (tile_h+2, W+2, Cmid)

    # conv2 (3x3, stride 1) + bn2 + relu as ONE long-K matmul over an
    # in-VMEM im2col tile (K = 9*Cmid) -- avoids 9 MRF drains on v5e/v6e.
    taps = [h1p[ky:ky + tile_h, kx:kx + width, :]
            for ky in range(3) for kx in range(3)]
    im2col = jnp.concatenate(taps, axis=-1).reshape(tile_h * width, 9 * cmid)
    h2 = jnp.dot(im2col, w2_ref[...], preferred_element_type=jnp.float32)
    h2 = jnp.maximum(h2 + b2_ref[...], 0.0).astype(jnp.bfloat16)

    # conv3 (1x1) + bn3 + residual add + relu -> dense interior-only bf16 out.
    out = jnp.dot(h2, w3_ref[...], preferred_element_type=jnp.float32)
    identity = x_main.reshape(tile_h * width, cin).astype(jnp.float32)
    out = jnp.maximum(out + b3_ref[...] + identity, 0.0)
    o_ref[...] = out.astype(o_ref.dtype)


# ------------------------------ JAX glue ----------------------------------- #

def _fold_bn(gamma, beta, mean, var, eps=1e-5):
    scale = gamma / jnp.sqrt(var + eps)
    bias = beta - mean * scale
    return scale, bias


def _pick_tile_h(H, W):
    """Largest divisor of H giving ~<=512 pixel rows per tile and (when
    possible) >=2 row blocks, so the grid has enough steps to pipeline and to
    feed both v7x TensorCores."""
    target = max(1, min(max(1, H // 2), max(1, 512 // max(W, 1))))
    for t in range(target, 0, -1):
        if H % t == 0:
            return t
    return 1


def bottleneck_forward(x_nchw, params, stride=1):
    """Pallas implementation of Bottleneck.forward (downsample=None, eval BN)."""
    N, Cin, H, W = x_nchw.shape
    w1, w2, w3 = params["w1"], params["w2"], params["w3"]
    Cmid = w1.shape[0]
    Cout = w3.shape[0]

    # downsample is None in the reference module -> identity residual.
    assert stride == 1 and Cout == Cin, (
        "Bottleneck with downsample=None requires stride == 1 and "
        "out_channel * expansion == in_channel")

    tile_h = _pick_tile_h(H, W)
    n_blk = H // tile_h

    # Single layout pass (NCHW -> NHWC bf16); no HBM padding / slicing passes.
    # NHWC pixel-rows is the natural inter-layer format for stacked blocks.
    x_nhwc = jnp.transpose(x_nchw, (0, 2, 3, 1)).astype(jnp.bfloat16)

    # Fold inference BatchNorm into the weight columns (+ f32 biases).
    s1, b1 = _fold_bn(*params["bn1"])
    s2, b2 = _fold_bn(*params["bn2"])
    s3, b3 = _fold_bn(*params["bn3"])

    w1f = (jnp.transpose(w1.reshape(Cmid, Cin), (1, 0)) * s1[None, :]
           ).astype(jnp.bfloat16)                                    # (Cin, Cmid)
    w2f = (jnp.transpose(w2, (2, 3, 1, 0)).reshape(9 * Cmid, Cmid)
           * s2[None, :]).astype(jnp.bfloat16)                       # (9*Cmid, Cmid)
    w3f = (jnp.transpose(w3.reshape(Cout, Cmid), (1, 0)) * s3[None, :]
           ).astype(jnp.bfloat16)                                    # (Cmid, Cout)
    b1 = b1.reshape(1, Cmid).astype(jnp.float32)
    b2 = b2.reshape(1, Cmid).astype(jnp.float32)
    b3 = b3.reshape(1, Cout).astype(jnp.float32)

    kernel = functools.partial(_bottleneck_kernel, tile_h=tile_h, width=W,
                               n_row_blocks=n_blk)

    out_rows = pl.pallas_call(
        kernel,
        out_shape=jax.ShapeDtypeStruct((N, H * W, Cout), jnp.bfloat16),
        grid=(N, n_blk),
        in_specs=[
            # main TILE_H rows of image n
            pl.BlockSpec((None, tile_h, W, Cin), lambda n, j: (n, j, 0, 0)),
            # 1-row halo above (clamped at the top edge; kernel zeroes it)
            pl.BlockSpec((None, 1, W, Cin),
                         lambda n, j: (n, jnp.maximum(j * tile_h - 1, 0), 0, 0)),
            # 1-row halo below (clamped at the bottom edge; kernel zeroes it)
            pl.BlockSpec((None, 1, W, Cin),
                         lambda n, j: (n, jnp.minimum((j + 1) * tile_h, H - 1), 0, 0)),
            pl.BlockSpec((Cin, Cmid), lambda n, j: (0, 0)),          # w1 (folded)
            pl.BlockSpec((1, Cmid), lambda n, j: (0, 0)),            # b1
            pl.BlockSpec((9 * Cmid, Cmid), lambda n, j: (0, 0)),     # w2 (folded, 2-D)
            pl.BlockSpec((1, Cmid), lambda n, j: (0, 0)),            # b2
            pl.BlockSpec((Cmid, Cout), lambda n, j: (0, 0)),         # w3 (folded)
            pl.BlockSpec((1, Cout), lambda n, j: (0, 0)),            # b3
        ],
        out_specs=pl.BlockSpec((None, tile_h * W, Cout), lambda n, j: (n, j, 0)),
        compiler_params=pltpu.CompilerParams(
            dimension_semantics=("parallel", "parallel"),
            # Sized for v7x's 64 MiB physical VMEM; per-step footprint is a
            # few MiB at real ResNet shapes, so double-buffering stays alive.
            vmem_limit_bytes=32 * 1024 * 1024,
        ),
    )(x_nhwc, x_nhwc, x_nhwc, w1f, b1, w2f, b2, w3f, b3)

    out = out_rows.reshape(N, H, W, Cout).astype(jnp.float32)
    return jnp.transpose(out, (0, 3, 1, 2))                 # back to NCHW


# -------------------------- pure-JAX reference ------------------------------ #

def _ref_forward(x_nchw, params, stride=1):
    x = jnp.transpose(x_nchw, (0, 2, 3, 1)).astype(jnp.float32)  # NHWC
    dn = ("NHWC", "HWIO", "NHWC")

    def conv(x, w, stride, pad):
        w_hwio = jnp.transpose(w, (2, 3, 1, 0))
        return lax.conv_general_dilated(x, w_hwio, (stride, stride),
                                        [(pad, pad), (pad, pad)],
                                        dimension_numbers=dn)

    def bn(x, p, eps=1e-5):
        g, b, m, v = p
        return (x - m) / jnp.sqrt(v + eps) * g + b

    ident = x
    o = jax.nn.relu(bn(conv(x, params["w1"], 1, 0), params["bn1"]))
    o = jax.nn.relu(bn(conv(o, params["w2"], stride, 1), params["bn2"]))
    o = bn(conv(o, params["w3"], 1, 0), params["bn3"])
    o = jax.nn.relu(o + ident)
    return jnp.transpose(o, (0, 3, 1, 2))


# --------------------------------- main ------------------------------------- #

if __name__ == "__main__":
    # Bottleneck(in_channel=16, out_channel=4), expansion=4, stride=1, downsample=None
    in_channel, out_channel, expansion, stride = 16, 4, 4, 1
    N, H, W = 2, 16, 16

    key = jax.random.PRNGKey(0)
    ks = jax.random.split(key, 16)

    def bn_params(k, c):
        k1, k2, k3, k4 = jax.random.split(k, 4)
        gamma = 1.0 + 0.1 * jax.random.normal(k1, (c,), jnp.float32)
        beta = 0.1 * jax.random.normal(k2, (c,), jnp.float32)
        mean = 0.1 * jax.random.normal(k3, (c,), jnp.float32)
        var = jnp.abs(jax.random.normal(k4, (c,), jnp.float32)) + 0.5
        return (gamma, beta, mean, var)

    params = {
        "w1": 0.1 * jax.random.normal(ks[0], (out_channel, in_channel, 1, 1), jnp.float32),
        "bn1": bn_params(ks[1], out_channel),
        "w2": 0.1 * jax.random.normal(ks[2], (out_channel, out_channel, 3, 3), jnp.float32),
        "bn2": bn_params(ks[3], out_channel),
        "w3": 0.1 * jax.random.normal(ks[4], (out_channel * expansion, out_channel, 1, 1), jnp.float32),
        "bn3": bn_params(ks[5], out_channel * expansion),
    }

    x = jax.random.normal(ks[6], (N, in_channel, H, W), jnp.float32)  # NCHW, like PyTorch

    fwd = jax.jit(functools.partial(bottleneck_forward, stride=stride))
    out = jax.block_until_ready(fwd(x, params))

    ref = jax.block_until_ready(_ref_forward(x, params, stride=stride))
    assert out.shape == (N, out_channel * expansion, H, W), out.shape
    # bf16 matmuls / bf16 interim activations (f32 accumulation) vs. f32 ref.
    err = float(jnp.max(jnp.abs(out - ref)))
    assert jnp.allclose(out, ref, atol=5e-2, rtol=5e-2), err

    print("KERNEL_OK")
</pallas_src>

<mosaic_0001>
module attributes {stable_mosaic.version = 11 : i64} {
  func.func @_bottleneck_kernel(%arg0: i32, %arg1: i32, %arg2: memref<1x8x16x16xbf16, #tpu.memory_space<vmem>>, %arg3: memref<1x1x16x16xbf16, #tpu.memory_space<vmem>>, %arg4: memref<1x1x16x16xbf16, #tpu.memory_space<vmem>>, %arg5: memref<16x4xbf16, #tpu.memory_space<vmem>>, %arg6: memref<1x4xf32, #tpu.memory_space<vmem>>, %arg7: memref<36x4xbf16, #tpu.memory_space<vmem>>, %arg8: memref<1x4xf32, #tpu.memory_space<vmem>>, %arg9: memref<4x16xbf16, #tpu.memory_space<vmem>>, %arg10: memref<1x16xf32, #tpu.memory_space<vmem>>, %arg11: memref<1x128x16xbf16, #tpu.memory_space<vmem>>) attributes {dimension_semantics = [#tpu.dimension_semantics<parallel>, #tpu.dimension_semantics<parallel>], iteration_bounds = array<i64: 2, 2>, scalar_prefetch = 0 : i64, scratch_operands = 0 : i64, tpu.core_type = #tpu.core_type<tc>, window_params = [{transform_indices = @transform_0, window_bounds = array<i64: 1, 8, 16, 16>}, {transform_indices = @transform_1, window_bounds = array<i64: 1, 1, 16, 16>}, {transform_indices = @transform_2, window_bounds = array<i64: 1, 1, 16, 16>}, {pipeline_mode = #tpu.pipeline_mode<synchronous>, transform_indices = @transform_3, window_bounds = array<i64: 16, 4>}, {pipeline_mode = #tpu.pipeline_mode<synchronous>, transform_indices = @transform_4, window_bounds = array<i64: 1, 4>}, {pipeline_mode = #tpu.pipeline_mode<synchronous>, transform_indices = @transform_5, window_bounds = array<i64: 36, 4>}, {pipeline_mode = #tpu.pipeline_mode<synchronous>, transform_indices = @transform_6, window_bounds = array<i64: 1, 4>}, {pipeline_mode = #tpu.pipeline_mode<synchronous>, transform_indices = @transform_7, window_bounds = array<i64: 4, 16>}, {pipeline_mode = #tpu.pipeline_mode<synchronous>, transform_indices = @transform_8, window_bounds = array<i64: 1, 16>}, {transform_indices = @transform_9, window_bounds = array<i64: 1, 128, 16>}]} {
    %c0 = arith.constant 0 : index
    %c0_0 = arith.constant 0 : index
    %c0_1 = arith.constant 0 : index
    %c0_2 = arith.constant 0 : index
    %0 = vector.load %arg2[%c0, %c0_0, %c0_1, %c0_2] : memref<1x8x16x16xbf16, #tpu.memory_space<vmem>>, vector<1x8x16x16xbf16>
    %1 = vector.shape_cast %0 : vector<1x8x16x16xbf16> to vector<8x16x16xbf16>
    %c0_3 = arith.constant 0 : index
    %c0_4 = arith.constant 0 : index
    %c0_5 = arith.constant 0 : index
    %c0_6 = arith.constant 0 : index
    %2 = vector.load %arg3[%c0_3, %c0_4, %c0_5, %c0_6] : memref<1x1x16x16xbf16, #tpu.memory_space<vmem>>, vector<1x1x16x16xbf16>
    %3 = vector.shape_cast %2 : vector<1x1x16x16xbf16> to vector<1x16x16xbf16>
    %c0_7 = arith.constant 0 : index
    %c0_8 = arith.constant 0 : index
    %c0_9 = arith.constant 0 : index
    %c0_10 = arith.constant 0 : index
    %4 = vector.load %arg4[%c0_7, %c0_8, %c0_9, %c0_10] : memref<1x1x16x16xbf16, #tpu.memory_space<vmem>>, vector<1x1x16x16xbf16>
    %5 = vector.shape_cast %4 : vector<1x1x16x16xbf16> to vector<1x16x16xbf16>
    %6 = tpu.concatenate %3, %1, %5 in 0 : vector<1x16x16xbf16>, vector<8x16x16xbf16>, vector<1x16x16xbf16> -> vector<10x16x16xbf16>
    %7 = vector.shape_cast %6 : vector<10x16x16xbf16> to vector<160x16xbf16>
    %c0_11 = arith.constant 0 : index
    %c0_12 = arith.constant 0 : index
    %8 = vector.load %arg5[%c0_11, %c0_12] : memref<16x4xbf16, #tpu.memory_space<vmem>>, vector<16x4xbf16>
    %cst = arith.constant dense<0.000000e+00> : vector<160x4xf32>
    %9 = tpu.matmul %7, %8, %cst {dimension_numbers = #tpu.dot_dimension_numbers<[1], [0], [0], [1], [0, 0, 1, 1], [], []>} : vector<160x16xbf16>, vector<16x4xbf16>, vector<160x4xf32> -> vector<160x4xf32>
    %c0_13 = arith.constant 0 : index
    %c0_14 = arith.constant 0 : index
    %10 = vector.load %arg6[%c0_13, %c0_14] : memref<1x4xf32, #tpu.memory_space<vmem>>, vector<1x4xf32>
    %11 = vector.broadcast %10 : vector<1x4xf32> to vector<160x4xf32>
    %12 = arith.addf %9, %11 : vector<160x4xf32>
    %cst_15 = arith.constant 0.000000e+00 : f32
    %13 = vector.broadcast %cst_15 : f32 to vector<160x4xf32>
    %14 = arith.maximumf %12, %13 : vector<160x4xf32>
    %15 = vector.shape_cast %14 : vector<160x4xf32> to vector<10x16x4xf32>
    %16 = tpu.iota {dimensions = array<i32: 0>} : vector<10x1x1xi32>
    %c0_i32 = arith.constant 0 : i32
    %17 = vector.broadcast %c0_i32 : i32 to vector<10x1x1xi32>
    %18 = arith.cmpi ne, %16, %17 : vector<10x1x1xi32>
    %c0_i32_16 = arith.constant 0 : i32
    %19 = arith.cmpi sgt, %arg1, %c0_i32_16 : i32
    %20 = vector.broadcast %19 : i1 to vector<10x1x1xi1>
    %21 = arith.ori %18, %20 : vector<10x1x1xi1>
    %c9_i32 = arith.constant 9 : i32
    %22 = vector.broadcast %c9_i32 : i32 to vector<10x1x1xi32>
    %23 = arith.cmpi ne, %16, %22 : vector<10x1x1xi32>
    %c1_i32 = arith.constant 1 : i32
    %24 = arith.cmpi slt, %arg1, %c1_i32 : i32
    %25 = vector.broadcast %24 : i1 to vector<10x1x1xi1>
    %26 = arith.ori %23, %25 : vector<10x1x1xi1>
    %27 = arith.andi %21, %26 : vector<10x1x1xi1>
    %cst_17 = arith.constant 0.000000e+00 : f32
    %28 = vector.shape_cast %27 : vector<10x1x1xi1> to vector<10x1x1xi1>
    %29 = vector.broadcast %28 : vector<10x1x1xi1> to vector<10x16x4xi1>
    %30 = vector.broadcast %cst_17 : f32 to vector<10x16x4xf32>
    %31 = arith.select %29, %15, %30 : vector<10x16x4xi1>, vector<10x16x4xf32>
    %32 = arith.truncf %31 : vector<10x16x4xf32> to vector<10x16x4xbf16>
    %cst_18 = arith.constant 0.000000e+00 : bf16
    %33 = vector.broadcast %cst_18 : bf16 to vector<10x1x4xbf16>
    %34 = tpu.concatenate %33, %32, %33 in 1 : vector<10x1x4xbf16>, vector<10x16x4xbf16>, vector<10x1x4xbf16> -> vector<10x18x4xbf16>
    %35 = vector.extract_strided_slice %34 {offsets = [0, 0, 0], sizes = [8, 16, 4], strides = [1, 1, 1]} : vector<10x18x4xbf16> to vector<8x16x4xbf16>
    %36 = vector.extract_strided_slice %34 {offsets = [0, 1, 0], sizes = [8, 16, 4], strides = [1, 1, 1]} : vector<10x18x4xbf16> to vector<8x16x4xbf16>
    %37 = vector.extract_strided_slice %34 {offsets = [0, 2, 0], sizes = [8, 16, 4], strides = [1, 1, 1]} : vector<10x18x4xbf16> to vector<8x16x4xbf16>
    %38 = vector.extract_strided_slice %34 {offsets = [1, 0, 0], sizes = [8, 16, 4], strides = [1, 1, 1]} : vector<10x18x4xbf16> to vector<8x16x4xbf16>
    %39 = vector.extract_strided_slice %34 {offsets = [1, 1, 0], sizes = [8, 16, 4], strides = [1, 1, 1]} : vector<10x18x4xbf16> to vector<8x16x4xbf16>
    %40 = vector.extract_strided_slice %34 {offsets = [1, 2, 0], sizes = [8, 16, 4], strides = [1, 1, 1]} : vector<10x18x4xbf16> to vector<8x16x4xbf16>
    %41 = vector.extract_strided_slice %34 {offsets = [2, 0, 0], sizes = [8, 16, 4], strides = [1, 1, 1]} : vector<10x18x4xbf16> to vector<8x16x4xbf16>
    %42 = vector.extract_strided_slice %34 {offsets = [2, 1, 0], sizes = [8, 16, 4], strides = [1, 1, 1]} : vector<10x18x4xbf16> to vector<8x16x4xbf16>
    %43 = vector.extract_strided_slice %34 {offsets = [2, 2, 0], sizes = [8, 16, 4], strides = [1, 1, 1]} : vector<10x18x4xbf16> to vector<8x16x4xbf16>
    %44 = tpu.concatenate %35, %36, %37, %38, %39, %40, %41, %42, %43 in 2 : vector<8x16x4xbf16>, vector<8x16x4xbf16>, vector<8x16x4xbf16>, vector<8x16x4xbf16>, vector<8x16x4xbf16>, vector<8x16x4xbf16>, vector<8x16x4xbf16>, vector<8x16x4xbf16>, vector<8x16x4xbf16> -> vector<8x16x36xbf16>
    %45 = vector.shape_cast %44 : vector<8x16x36xbf16> to vector<128x36xbf16>
    %c0_19 = arith.constant 0 : index
    %c0_20 = arith.constant 0 : index
    %46 = vector.load %arg7[%c0_19, %c0_20] : memref<36x4xbf16, #tpu.memory_space<vmem>>, vector<36x4xbf16>
    %cst_21 = arith.constant dense<0.000000e+00> : vector<128x4xf32>
    %47 = tpu.matmul %45, %46, %cst_21 {dimension_numbers = #tpu.dot_dimension_numbers<[1], [0], [0], [1], [0, 0, 1, 1], [], []>} : vector<128x36xbf16>, vector<36x4xbf16>, vector<128x4xf32> -> vector<128x4xf32>
    %c0_22 = arith.constant 0 : index
    %c0_23 = arith.constant 0 : index
    %48 = vector.load %arg8[%c0_22, %c0_23] : memref<1x4xf32, #tpu.memory_space<vmem>>, vector<1x4xf32>
    %49 = vector.broadcast %48 : vector<1x4xf32> to vector<128x4xf32>
    %50 = arith.addf %47, %49 : vector<128x4xf32>
    %cst_24 = arith.constant 0.000000e+00 : f32
    %51 = vector.broadcast %cst_24 : f32 to vector<128x4xf32>
    %52 = arith.maximumf %50, %51 : vector<128x4xf32>
    %53 = arith.truncf %52 : vector<128x4xf32> to vector<128x4xbf16>
    %c0_25 = arith.constant 0 : index
    %c0_26 = arith.constant 0 : index
    %54 = vector.load %arg9[%c0_25, %c0_26] : memref<4x16xbf16, #tpu.memory_space<vmem>>, vector<4x16xbf16>
    %cst_27 = arith.constant dense<0.000000e+00> : vector<128x16xf32>
    %55 = tpu.matmul %53, %54, %cst_27 {dimension_numbers = #tpu.dot_dimension_numbers<[1], [0], [0], [1], [0, 0, 1, 1], [], []>} : vector<128x4xbf16>, vector<4x16xbf16>, vector<128x16xf32> -> vector<128x16xf32>
    %56 = vector.shape_cast %1 : vector<8x16x16xbf16> to vector<128x16xbf16>
    %57 = arith.extf %56 : vector<128x16xbf16> to vector<128x16xf32>
    %c0_28 = arith.constant 0 : index
    %c0_29 = arith.constant 0 : index
    %58 = vector.load %arg10[%c0_28, %c0_29] : memref<1x16xf32, #tpu.memory_space<vmem>>, vector<1x16xf32>
    %59 = vector.broadcast %58 : vector<1x16xf32> to vector<128x16xf32>
    %60 = arith.addf %55, %59 : vector<128x16xf32>
    %61 = arith.addf %60, %57 : vector<128x16xf32>
    %cst_30 = arith.constant 0.000000e+00 : f32
    %62 = vector.broadcast %cst_30 : f32 to vector<128x16xf32>
    %63 = arith.maximumf %61, %62 : vector<128x16xf32>
    %64 = arith.truncf %63 : vector<128x16xf32> to vector<128x16xbf16>
    %c0_31 = arith.constant 0 : index
    %c0_32 = arith.constant 0 : index
    %c0_33 = arith.constant 0 : index
    %65 = vector.load %arg11[%c0_31, %c0_32, %c0_33] : memref<1x128x16xbf16, #tpu.memory_space<vmem>>, vector<1x128x16xbf16>
    %66 = vector.shape_cast %65 : vector<1x128x16xbf16> to vector<128x16xbf16>
    %67 = vector.shape_cast %64 : vector<128x16xbf16> to vector<1x128x16xbf16>
    tpu.vector_store %arg11[%c0_31, %c0_32, %c0_33], %67 {strides = array<i32>} : memref<1x128x16xbf16, #tpu.memory_space<vmem>>, vector<1x128x16xbf16>,
    return
  }
  func.func @transform_0(%arg0: i32, %arg1: i32) -> (i32, i32, i32, i32) {
    %c0_i32 = arith.constant 0 : i32
    %c0_i32_0 = arith.constant 0 : i32
    %c0_i32_1 = arith.constant 0 : i32
    return %arg0, %arg1, %c0_i32, %c0_i32_0 : i32, i32, i32, i32
  }
  func.func @transform_1(%arg0: i32, %arg1: i32) -> (i32, i32, i32, i32) {
    %c8_i32 = arith.constant 8 : i32
    %0 = arith.muli %arg1, %c8_i32 : i32
    %c1_i32 = arith.constant 1 : i32
    %1 = arith.subi %0, %c1_i32 : i32
    %c0_i32 = arith.constant 0 : i32
    %2 = arith.maxsi %1, %c0_i32 : i32
    %c0_i32_0 = arith.constant 0 : i32
    %c0_i32_1 = arith.constant 0 : i32
    %c0_i32_2 = arith.constant 0 : i32
    return %arg0, %2, %c0_i32_0, %c0_i32_1 : i32, i32, i32, i32
  }
  func.func @transform_2(%arg0: i32, %arg1: i32) -> (i32, i32, i32, i32) {
    %c1_i32 = arith.constant 1 : i32
    %0 = arith.addi %arg1, %c1_i32 : i32
    %c8_i32 = arith.constant 8 : i32
    %1 = arith.muli %0, %c8_i32 : i32
    %c15_i32 = arith.constant 15 : i32
    %2 = arith.minsi %1, %c15_i32 : i32
    %c0_i32 = arith.constant 0 : i32
    %c0_i32_0 = arith.constant 0 : i32
    %c0_i32_1 = arith.constant 0 : i32
    return %arg0, %2, %c0_i32, %c0_i32_0 : i32, i32, i32, i32
  }
  func.func @transform_3(%arg0: i32, %arg1: i32) -> (i32, i32) {
    %c0_i32 = arith.constant 0 : i32
    %c0_i32_0 = arith.constant 0 : i32
    %c0_i32_1 = arith.constant 0 : i32
    return %c0_i32, %c0_i32_0 : i32, i32
  }
  func.func @transform_4(%arg0: i32, %arg1: i32) -> (i32, i32) {
    %c0_i32 = arith.constant 0 : i32
    %c0_i32_0 = arith.constant 0 : i32
    %c0_i32_1 = arith.constant 0 : i32
    return %c0_i32, %c0_i32_0 : i32, i32
  }
  func.func @transform_5(%arg0: i32, %arg1: i32) -> (i32, i32) {
    %c0_i32 = arith.constant 0 : i32
    %c0_i32_0 = arith.constant 0 : i32
    %c0_i32_1 = arith.constant 0 : i32
    return %c0_i32, %c0_i32_0 : i32, i32
  }
  func.func @transform_6(%arg0: i32, %arg1: i32) -> (i32, i32) {
    %c0_i32 = arith.constant 0 : i32
    %c0_i32_0 = arith.constant 0 : i32
    %c0_i32_1 = arith.constant 0 : i32
    return %c0_i32, %c0_i32_0 : i32, i32
  }
  func.func @transform_7(%arg0: i32, %arg1: i32) -> (i32, i32) {
    %c0_i32 = arith.constant 0 : i32
    %c0_i32_0 = arith.constant 0 : i32
    %c0_i32_1 = arith.constant 0 : i32
    return %c0_i32, %c0_i32_0 : i32, i32
  }
  func.func @transform_8(%arg0: i32, %arg1: i32) -> (i32, i32) {
    %c0_i32 = arith.constant 0 : i32
    %c0_i32_0 = arith.constant 0 : i32
    %c0_i32_1 = arith.constant 0 : i32
    return %c0_i32, %c0_i32_0 : i32, i32
  }
  func.func @transform_9(%arg0: i32, %arg1: i32) -> (i32, i32, i32) {
    %c0_i32 = arith.constant 0 : i32
    %c0_i32_0 = arith.constant 0 : i32
    return %arg0, %arg1, %c0_i32 : i32, i32, i32
  }
}

</mosaic_0001>

<llo_original>
// kernel: bottleneck_forward.1
$region0: #{bottleneck_forward.1}
  #allocation0 [shape = 'u32[]', space=smem, size = 0x4, offset = 0x4, fixed_abs, tag = 'smem constant byte address 0x4 - core index']
  #allocation1 [shape = 'u32[144,128]{1,0:T(1,128)}', space=vmem, size = 0x12000, scoped, tag = 'internal scratch']
  %s0 = inlined_call_operand.vmem [shape: bf16[2,16,16,16], index: 0, kind: input, shape index: {}, may-alias: {0,1,2}]
  %s1 = inlined_call_operand.vmem [shape: bf16[2,16,16,16], index: 1, kind: input, shape index: {}, may-alias: {0,1,2}]
  %s2 = inlined_call_operand.vmem [shape: bf16[2,16,16,16], index: 2, kind: input, shape index: {}, may-alias: {0,1,2}]
  %s3 = inlined_call_operand.vmem [shape: bf16[16,4], index: 3, kind: input, shape index: {}]
  %s4 = inlined_call_operand.vmem [shape: f32[1,4], index: 4, kind: input, shape index: {}]
  %s5 = inlined_call_operand.vmem [shape: bf16[36,4], index: 5, kind: input, shape index: {}]
  %s6 = inlined_call_operand.vmem [shape: f32[1,4], index: 6, kind: input, shape index: {}]
  %s7 = inlined_call_operand.vmem [shape: bf16[4,16], index: 7, kind: input, shape index: {}]
  %s8 = inlined_call_operand.vmem [shape: f32[1,16], index: 8, kind: input, shape index: {}]
  %s9 = inlined_call_operand.vmem [shape: bf16[2,256,16], index: 9, kind: output, shape index: {}]
  %s10 = sld [smem:[#allocation0]]
  $region69: #{bottleneck_forward.1} parent=0
    _
  %s12 = ssub.s32 1, %s10
  %s13 = scalar_select 0, %s12, %s10
  loop: start=0, step=1, limit=6
  $region2: #{bottleneck_forward.1} parent=0 // loop_pre_header
    _
  $region3: #{bottleneck_forward.1} parent=0 // loop_header
    %s15 = sphi 0, %s19
    %p16 = scmp.ge.s32.totalorder %s15, 6
    %s22 = sphi 0, %s34
    %s23 = sphi 0, %s30
    %s24 = sphi 0, %s22
    %s25 = sphi 0, %s23
    %s26 = sphi 0, %s24
    %s27 = sphi 0, %s25
    %s39 = sphi 0, %s41
    %s42 = sphi 0, %s39
    %s43 = sphi 0, %s42
    %s59 = sphi 0, %s43
    %s75 = sphi 0, %s77
    %s78 = sphi 0, %s75
    %s79 = sphi 0, %s78
    %s95 = sphi 0, %s79
    %s111 = sphi 0, %s113
    %s114 = sphi 0, %s111
    %s115 = sphi 0, %s114
    %s131 = sphi 0, %s115
    %s135 = sphi 0, %s135
    %s137 = sphi 0, %s135
    %s138 = sphi 0, %s137
    %s152 = sphi 0, %s138
    %s156 = sphi 0, %s156
    %s158 = sphi 0, %s156
    %s159 = sphi 0, %s158
    %s173 = sphi 0, %s159
    %s177 = sphi 0, %s177
    %s179 = sphi 0, %s177
    %s180 = sphi 0, %s179
    %s194 = sphi 0, %s180
    %s198 = sphi 0, %s198
    %s200 = sphi 0, %s198
    %s201 = sphi 0, %s200
    %s215 = sphi 0, %s201
    %s219 = sphi 0, %s219
    %s221 = sphi 0, %s219
    %s222 = sphi 0, %s221
    %s236 = sphi 0, %s222
    %s240 = sphi 0, %s240
    %s242 = sphi 0, %s240
    %s243 = sphi 0, %s242
    %s257 = sphi 0, %s243
    %s265 = sphi 0, %s267
    %s268 = sphi 0, %s265
    %s269 = sphi 0, %s268
    %s285 = sphi 0, %s269
  $region4: #{bottleneck_forward.1} parent=0 // loop_header_branch
    %18 = sbr.rel (%p16) target = $region8
  $region5: #{bottleneck_forward.1} parent=0 // loop_body
    %s20 = ssub.s32 %s15, 1
    %s21 = ssub.s32 %s15, 2
    %s28 = sadd.s32 1, %s23
    %p29 = scmp.ge.s32.totalorder %s28, 2
    %s30 = scalar_select %p29, 0, %s28
    %s31 = sadd.s32 1, %s22
    %s32 = scalar_select %p29, %s31, %s22
    %p33 = scmp.ge.s32.totalorder %s32, 2
    %s34 = scalar_select %p33, 0, %s32
    %s35 = ssub.s32 %s22, %s34
    %s36 = ssub.s32 %s23, %s30
    %s37 = sor.u32 %s35, %s36
    %p38 = scmp.eq.s32.totalorder %s37, 0
    %s40 = sadd.s32 %s39, 1
    %s41 = scalar_select %p38, %s39, %s40
    %p44 = pneg %p38
    %p45 = scmp.eq.s32.totalorder %s15, 3
    %p46 = por %p44, %p45
    %p47 = scmp.ne.s32.totalorder %s39, %s42
    %p48 = scmp.eq.s32.totalorder %s15, 0
    %p49 = por %p47, %p48
    %p50 = scmp.ne.s32.totalorder %s39, %s42
    %p51 = scmp.eq.s32.totalorder %s20, 3
    %p52 = por %p50, %p51
    %p53 = scmp.ne.s32.totalorder %s42, %s43
    %p54 = scmp.eq.s32.totalorder %s20, 0
    %p55 = por %p53, %p54
    %p56 = scmp.ne.s32.totalorder %s42, %s43
    %p57 = scmp.eq.s32.totalorder %s21, 3
    %p58 = por %p56, %p57
    %p60 = scmp.ne.s32.totalorder %s43, %s59
    %p61 = scmp.eq.s32.totalorder %s21, 0
    %p62 = por %p60, %p61
    %s63 = smul.u32 %s23, 8
    %s64 = ssub.s32 %s63, 1
    %p65 = scmp.gt.s32.totalorder %s64, 0
    %s66 = scalar_select %p65, %s64, 0
    %s67 = smul.u32 %s30, 8
    %s68 = ssub.s32 %s67, 1
    %p69 = scmp.gt.s32.totalorder %s68, 0
    %s70 = scalar_select %p69, %s68, 0
    %s71 = ssub.s32 %s22, %s34
    %s72 = ssub.s32 %s66, %s70
    %s73 = sor.u32 %s71, %s72
    %p74 = scmp.eq.s32.totalorder %s73, 0
    %s76 = sadd.s32 %s75, 1
    %s77 = scalar_select %p74, %s75, %s76
    %p80 = pneg %p74
    %p81 = scmp.eq.s32.totalorder %s15, 3
    %p82 = por %p80, %p81
    %p83 = scmp.ne.s32.totalorder %s75, %s78
    %p84 = scmp.eq.s32.totalorder %s15, 0
    %p85 = por %p83, %p84
    %p86 = scmp.ne.s32.totalorder %s75, %s78
    %p87 = scmp.eq.s32.totalorder %s20, 3
    %p88 = por %p86, %p87
    %p89 = scmp.ne.s32.totalorder %s78, %s79
    %p90 = scmp.eq.s32.totalorder %s20, 0
    %p91 = por %p89, %p90
    %p92 = scmp.ne.s32.totalorder %s78, %s79
    %p93 = scmp.eq.s32.totalorder %s21, 3
    %p94 = por %p92, %p93
    %p96 = scmp.ne.s32.totalorder %s79, %s95
    %p97 = scmp.eq.s32.totalorder %s21, 0
    %p98 = por %p96, %p97
    %s99 = sadd.s32 %s23, 1
    %s100 = smul.u32 %s99, 8
    %p101 = scmp.lt.s32.totalorder %s100, 15
    %s102 = scalar_select %p101, %s100, 15
    %s103 = sadd.s32 %s30, 1
    %s104 = smul.u32 %s103, 8
    %p105 = scmp.lt.s32.totalorder %s104, 15
    %s106 = scalar_select %p105, %s104, 15
    %s107 = ssub.s32 %s22, %s34
    %s108 = ssub.s32 %s102, %s106
    %s109 = sor.u32 %s107, %s108
    %p110 = scmp.eq.s32.totalorder %s109, 0
    %s112 = sadd.s32 %s111, 1
    %s113 = scalar_select %p110, %s111, %s112
    %p116 = pneg %p110
    %p117 = scmp.eq.s32.totalorder %s15, 3
    %p118 = por %p116, %p117
    %p119 = scmp.ne.s32.totalorder %s111, %s114
    %p120 = scmp.eq.s32.totalorder %s15, 0
    %p121 = por %p119, %p120
    %p122 = scmp.ne.s32.totalorder %s111, %s114
    %p123 = scmp.eq.s32.totalorder %s20, 3
    %p124 = por %p122, %p123
    %p125 = scmp.ne.s32.totalorder %s114, %s115
    %p126 = scmp.eq.s32.totalorder %s20, 0
    %p127 = por %p125, %p126
    %p128 = scmp.ne.s32.totalorder %s114, %s115
    %p129 = scmp.eq.s32.totalorder %s21, 3
    %p130 = por %p128, %p129
    %p132 = scmp.ne.s32.totalorder %s115, %s131
    %p133 = scmp.eq.s32.totalorder %s21, 0
    %p134 = por %p132, %p133
    %s136 = sadd.s32 %s135, 1
    %p139 = scmp.eq.s32.totalorder %s15, 3
    %p140 = scmp.ne.s32.totalorder %s135, %s137
    %p141 = scmp.eq.s32.totalorder %s15, 0
    %p142 = por %p140, %p141
    %p143 = scmp.ne.s32.totalorder %s135, %s137
    %p144 = scmp.eq.s32.totalorder %s20, 3
    %p145 = por %p143, %p144
    %p146 = scmp.ne.s32.totalorder %s137, %s138
    %p147 = scmp.eq.s32.totalorder %s20, 0
    %p148 = por %p146, %p147
    %p149 = scmp.ne.s32.totalorder %s137, %s138
    %p150 = scmp.eq.s32.totalorder %s21, 3
    %p151 = por %p149, %p150
    %p153 = scmp.ne.s32.totalorder %s138, %s152
    %p154 = scmp.eq.s32.totalorder %s21, 0
    %p155 = por %p153, %p154
    %s157 = sadd.s32 %s156, 1
    %p160 = scmp.eq.s32.totalorder %s15, 3
    %p161 = scmp.ne.s32.totalorder %s156, %s158
    %p162 = scmp.eq.s32.totalorder %s15, 0
    %p163 = por %p161, %p162
    %p164 = scmp.ne.s32.totalorder %s156, %s158
    %p165 = scmp.eq.s32.totalorder %s20, 3
    %p166 = por %p164, %p165
    %p167 = scmp.ne.s32.totalorder %s158, %s159
    %p168 = scmp.eq.s32.totalorder %s20, 0
    %p169 = por %p167, %p168
    %p170 = scmp.ne.s32.totalorder %s158, %s159
    %p171 = scmp.eq.s32.totalorder %s21, 3
    %p172 = por %p170, %p171
    %p174 = scmp.ne.s32.totalorder %s159, %s173
    %p175 = scmp.eq.s32.totalorder %s21, 0
    %p176 = por %p174, %p175
    %s178 = sadd.s32 %s177, 1
    %p181 = scmp.eq.s32.totalorder %s15, 3
    %p182 = scmp.ne.s32.totalorder %s177, %s179
    %p183 = scmp.eq.s32.totalorder %s15, 0
    %p184 = por %p182, %p183
    %p185 = scmp.ne.s32.totalorder %s177, %s179
    %p186 = scmp.eq.s32.totalorder %s20, 3
    %p187 = por %p185, %p186
    %p188 = scmp.ne.s32.totalorder %s179, %s180
    %p189 = scmp.eq.s32.totalorder %s20, 0
    %p190 = por %p188, %p189
    %p191 = scmp.ne.s32.totalorder %s179, %s180
    %p192 = scmp.eq.s32.totalorder %s21, 3
    %p193 = por %p191, %p192
    %p195 = scmp.ne.s32.totalorder %s180, %s194
    %p196 = scmp.eq.s32.totalorder %s21, 0
    %p197 = por %p195, %p196
    %s199 = sadd.s32 %s198, 1
    %p202 = scmp.eq.s32.totalorder %s15, 3
    %p203 = scmp.ne.s32.totalorder %s198, %s200
    %p204 = scmp.eq.s32.totalorder %s15, 0
    %p205 = por %p203, %p204
    %p206 = scmp.ne.s32.totalorder %s198, %s200
    %p207 = scmp.eq.s32.totalorder %s20, 3
    %p208 = por %p206, %p207
    %p209 = scmp.ne.s32.totalorder %s200, %s201
    %p210 = scmp.eq.s32.totalorder %s20, 0
    %p211 = por %p209, %p210
    %p212 = scmp.ne.s32.totalorder %s200, %s201
    %p213 = scmp.eq.s32.totalorder %s21, 3
    %p214 = por %p212, %p213
    %p216 = scmp.ne.s32.totalorder %s201, %s215
    %p217 = scmp.eq.s32.totalorder %s21, 0
    %p218 = por %p216, %p217
    %s220 = sadd.s32 %s219, 1
    %p223 = scmp.eq.s32.totalorder %s15, 3
    %p224 = scmp.ne.s32.totalorder %s219, %s221
    %p225 = scmp.eq.s32.totalorder %s15, 0
    %p226 = por %p224, %p225
    %p227 = scmp.ne.s32.totalorder %s219, %s221
    %p228 = scmp.eq.s32.totalorder %s20, 3
    %p229 = por %p227, %p228
    %p230 = scmp.ne.s32.totalorder %s221, %s222
    %p231 = scmp.eq.s32.totalorder %s20, 0
    %p232 = por %p230, %p231
    %p233 = scmp.ne.s32.totalorder %s221, %s222
    %p234 = scmp.eq.s32.totalorder %s21, 3
    %p235 = por %p233, %p234
    %p237 = scmp.ne.s32.totalorder %s222, %s236
    %p238 = scmp.eq.s32.totalorder %s21, 0
    %p239 = por %p237, %p238
    %s241 = sadd.s32 %s240, 1
    %p244 = scmp.eq.s32.totalorder %s15, 3
    %p245 = scmp.ne.s32.totalorder %s240, %s242
    %p246 = scmp.eq.s32.totalorder %s15, 0
    %p247 = por %p245, %p246
    %p248 = scmp.ne.s32.totalorder %s240, %s242
    %p249 = scmp.eq.s32.totalorder %s20, 3
    %p250 = por %p248, %p249
    %p251 = scmp.ne.s32.totalorder %s242, %s243
    %p252 = scmp.eq.s32.totalorder %s20, 0
    %p253 = por %p251, %p252
    %p254 = scmp.ne.s32.totalorder %s242, %s243
    %p255 = scmp.eq.s32.totalorder %s21, 3
    %p256 = por %p254, %p255
    %p258 = scmp.ne.s32.totalorder %s243, %s257
    %p259 = scmp.eq.s32.totalorder %s21, 0
    %p260 = por %p258, %p259
    %s261 = ssub.s32 %s22, %s34
    %s262 = ssub.s32 %s23, %s30
    %s263 = sor.u32 %s261, %s262
    %p264 = scmp.eq.s32.totalorder %s263, 0
    %s266 = sadd.s32 %s265, 1
    %s267 = scalar_select %p264, %s265, %s266
    %p270 = pneg %p264
    %p271 = scmp.eq.s32.totalorder %s15, 3
    %p272 = por %p270, %p271
    %p273 = scmp.ne.s32.totalorder %s265, %s268
    %p274 = scmp.eq.s32.totalorder %s15, 0
    %p275 = por %p273, %p274
    %p276 = scmp.ne.s32.totalorder %s265, %s268
    %p277 = scmp.eq.s32.totalorder %s20, 3
    %p278 = por %p276, %p277
    %p279 = scmp.ne.s32.totalorder %s268, %s269
    %p280 = scmp.eq.s32.totalorder %s20, 0
    %p281 = por %p279, %p280
    %p282 = scmp.ne.s32.totalorder %s268, %s269
    %p283 = scmp.eq.s32.totalorder %s21, 3
    %p284 = por %p282, %p283
    %p286 = scmp.ne.s32.totalorder %s269, %s285
    %p287 = scmp.eq.s32.totalorder %s21, 0
    %p288 = por %p286, %p287
    %p289 = scmp.le.s32.totalorder 1, %s15
    %p290 = scmp.lt.s32.totalorder %s15, 5
    %p291 = pnand %p289, %p290
    %p292 = pneg %p291
    // Predicated region
    $region9: #{bottleneck_forward.1} parent=5 // pred_check
      _
    $region10: #{bottleneck_forward.1} parent=5 // pred_check_branch
      %294 = sbr.rel (%p291) target = $region12
    $region11: #{bottleneck_forward.1} parent=5 // pred_region
      %s295 = ssub.s32 %s15, 1
      // Predicated region
      $region13: #{bottleneck_forward.1} parent=11 // pred_check
        %p296 = pneg %p148
      $region14: #{bottleneck_forward.1} parent=11 // pred_check_branch
        %298 = sbr.rel (%p296) target = $region16
      $region15: #{bottleneck_forward.1} parent=11 // pred_region
        _
      $region16: #{bottleneck_forward.1} parent=11 // pred_fallthru
        _
      // Predicated region
      $region17: #{bottleneck_forward.1} parent=11 // pred_check
        %p299 = pneg %p169
      $region18: #{bottleneck_forward.1} parent=11 // pred_check_branch
        %301 = sbr.rel (%p299) target = $region20
      $region19: #{bottleneck_forward.1} parent=11 // pred_region
        _
      $region20: #{bottleneck_forward.1} parent=11 // pred_fallthru
        _
      // Predicated region
      $region21: #{bottleneck_forward.1} parent=11 // pred_check
        %p302 = pneg %p190
      $region22: #{bottleneck_forward.1} parent=11 // pred_check_branch
        %304 = sbr.rel (%p302) target = $region24
      $region23: #{bottleneck_forward.1} parent=11 // pred_region
        _
      $region24: #{bottleneck_forward.1} parent=11 // pred_fallthru
        _
      // Predicated region
      $region25: #{bottleneck_forward.1} parent=11 // pred_check
        %p305 = pneg %p211
      $region26: #{bottleneck_forward.1} parent=11 // pred_check_branch
        %307 = sbr.rel (%p305) target = $region28
      $region27: #{bottleneck_forward.1} parent=11 // pred_region
        _
      $region28: #{bottleneck_forward.1} parent=11 // pred_fallthru
        _
      // Predicated region
      $region29: #{bottleneck_forward.1} parent=11 // pred_check
        %p308 = pneg %p232
      $region30: #{bottleneck_forward.1} parent=11 // pred_check_branch
        %310 = sbr.rel (%p308) target = $region32
      $region31: #{bottleneck_forward.1} parent=11 // pred_region
        _
      $region32: #{bottleneck_forward.1} parent=11 // pred_fallthru
        _
      // Predicated region
      $region33: #{bottleneck_forward.1} parent=11 // pred_check
        %p311 = pneg %p253
      $region34: #{bottleneck_forward.1} parent=11 // pred_check_branch
        %313 = sbr.rel (%p311) target = $region36
      $region35: #{bottleneck_forward.1} parent=11 // pred_region
        _
      $region36: #{bottleneck_forward.1} parent=11 // pred_fallthru
        _
    $region12: #{bottleneck_forward.1} parent=5 // pred_fallthru
      _
    %p314 = scmp.lt.s32.totalorder %s15, 4
    // Predicated region
    $region37: #{bottleneck_forward.1} parent=5 // pred_check
      %p315 = pneg %p314
    $region38: #{bottleneck_forward.1} parent=5 // pred_check_branch
      %317 = sbr.rel (%p315) target = $region40
    $region39: #{bottleneck_forward.1} parent=5 // pred_region
      // Predicated region
      $region41: #{bottleneck_forward.1} parent=39 // pred_check
        %p318 = pneg %p49
      $region42: #{bottleneck_forward.1} parent=39 // pred_check_branch
        %320 = sbr.rel (%p318) target = $region44
      $region43: #{bottleneck_forward.1} parent=39 // pred_region
        %s321 = smul.u32 8, %s23
        %p322 = scmp.lt.s32.totalorder %s22, 1
        %s323 = scalar_select %p322, %s22, 1
        %p324 = scmp.lt.s32.totalorder %s321, 15
        %s325 = scalar_select %p324, %s321, 15
        %s326 = smul.addr %s325, 2
        %s327 = smul.addr %s323, 32
        %s328 = sadd.s32 %s326, %s327
        %s329 = smul.addr %s328, 4
        %s330 = scalar_lea.vmem %s0, %s329
        %s331 = smul.u32 8, %s23
      $region44: #{bottleneck_forward.1} parent=39 // pred_fallthru
        _
      // Predicated region
      $region45: #{bottleneck_forward.1} parent=39 // pred_check
        %p332 = pneg %p85
      $region46: #{bottleneck_forward.1} parent=39 // pred_check_branch
        %334 = sbr.rel (%p332) target = $region48
      $region47: #{bottleneck_forward.1} parent=39 // pred_region
        %s335 = smul.u32 %s23, 8
        %s336 = ssub.s32 %s335, 1
        %p337 = scmp.gt.s32.totalorder %s336, 0
        %s338 = scalar_select %p337, %s336, 0
        %p339 = scmp.lt.s32.totalorder %s22, 1
        %s340 = scalar_select %p339, %s22, 1
        %p341 = scmp.lt.s32.totalorder %s338, 15
        %s342 = scalar_select %p341, %s338, 15
        %s343 = smul.addr %s342, 2
        %s344 = smul.addr %s340, 32
        %s345 = sadd.s32 %s343, %s344
        %s346 = smul.addr %s345, 4
        %s347 = scalar_lea.vmem %s1, %s346
        %s348 = smul.u32 %s23, 8
        %s349 = ssub.s32 %s348, 1
        %p350 = scmp.gt.s32.totalorder %s349, 0
        %s351 = scalar_select %p350, %s349, 0
      $region48: #{bottleneck_forward.1} parent=39 // pred_fallthru
        _
      // Predicated region
      $region49: #{bottleneck_forward.1} parent=39 // pred_check
        %p352 = pneg %p121
      $region50: #{bottleneck_forward.1} parent=39 // pred_check_branch
        %354 = sbr.rel (%p352) target = $region52
      $region51: #{bottleneck_forward.1} parent=39 // pred_region
        %s355 = sadd.s32 %s23, 1
        %s356 = smul.u32 %s355, 8
        %p357 = scmp.lt.s32.totalorder %s356, 15
        %s358 = scalar_select %p357, %s356, 15
        %p359 = scmp.lt.s32.totalorder %s22, 1
        %s360 = scalar_select %p359, %s22, 1
        %p361 = scmp.lt.s32.totalorder %s358, 15
        %s362 = scalar_select %p361, %s358, 15
        %s363 = smul.addr %s362, 2
        %s364 = smul.addr %s360, 32
        %s365 = sadd.s32 %s363, %s364
        %s366 = smul.addr %s365, 4
        %s367 = scalar_lea.vmem %s2, %s366
        %s368 = sadd.s32 %s23, 1
        %s369 = smul.u32 %s368, 8
        %p370 = scmp.lt.s32.totalorder %s369, 15
        %s371 = scalar_select %p370, %s369, 15
      $region52: #{bottleneck_forward.1} parent=39 // pred_fallthru
        _
    $region40: #{bottleneck_forward.1} parent=5 // pred_fallthru
      _
    %p372 = scmp.le.s32.totalorder 1, %s15
    %p373 = scmp.lt.s32.totalorder %s15, 5
    %p374 = pnand %p372, %p373
    %p375 = pneg %p374
    // Predicated region
    $region53: #{bottleneck_forward.1} parent=5 // pred_check
      _
    $region54: #{bottleneck_forward.1} parent=5 // pred_check_branch
      %377 = sbr.rel (%p374) target = $region56
    $region55: #{bottleneck_forward.1} parent=5 // pred_region
      %s378 = ssub.s32 %s15, 1
      %s379 = smul.u32 8, %s25
      %p380 = scmp.lt.s32.totalorder %s24, 1
      %s381 = scalar_select %p380, %s24, 1
      %p382 = scmp.lt.s32.totalorder %s379, 15
      %s383 = scalar_select %p382, %s379, 15
      %s384 = smul.addr %s383, 2
      %s385 = smul.addr %s381, 32
      %s386 = sadd.s32 %s384, %s385
      %s387 = smul.addr %s386, 4
      %s388 = scalar_lea.vmem %s0, %s387
      %p389 = pneg %p55
      %p390 = pneg %p52
      %s391 = smul.u32 %s25, 8
      %s392 = ssub.s32 %s391, 1
      %p393 = scmp.gt.s32.totalorder %s392, 0
      %s394 = scalar_select %p393, %s392, 0
      %p395 = scmp.lt.s32.totalorder %s24, 1
      %s396 = scalar_select %p395, %s24, 1
      %p397 = scmp.lt.s32.totalorder %s394, 15
      %s398 = scalar_select %p397, %s394, 15
      %s399 = smul.addr %s398, 2
      %s400 = smul.addr %s396, 32
      %s401 = sadd.s32 %s399, %s400
      %s402 = smul.addr %s401, 4
      %s403 = scalar_lea.vmem %s1, %s402
      %p404 = pneg %p91
      %p405 = pneg %p88
      %s406 = sadd.s32 %s25, 1
      %s407 = smul.u32 %s406, 8
      %p408 = scmp.lt.s32.totalorder %s407, 15
      %s409 = scalar_select %p408, %s407, 15
      %p410 = scmp.lt.s32.totalorder %s24, 1
      %s411 = scalar_select %p410, %s24, 1
      %p412 = scmp.lt.s32.totalorder %s409, 15
      %s413 = scalar_select %p412, %s409, 15
      %s414 = smul.addr %s413, 2
      %s415 = smul.addr %s411, 32
      %s416 = sadd.s32 %s414, %s415
      %s417 = smul.addr %s416, 4
      %s418 = scalar_lea.vmem %s2, %s417
      %p419 = pneg %p127
      %p420 = pneg %p124
      %p421 = pneg %p148
      %p422 = pneg %p145
      %p423 = pneg %p169
      %p424 = pneg %p166
      %p425 = pneg %p190
      %p426 = pneg %p187
      %p427 = pneg %p211
      %p428 = pneg %p208
      %p429 = pneg %p232
      %p430 = pneg %p229
      %p431 = pneg %p253
      %p432 = pneg %p250
      %p433 = pneg %p281
      %p434 = pneg %p278
      %s435 = smul.u32 16, %s25
      %p436 = scmp.lt.s32.totalorder %s24, 1
      %s437 = scalar_select %p436, %s24, 1
      %p438 = scmp.lt.s32.totalorder %s435, 31
      %s439 = scalar_select %p438, %s435, 31
      %s440 = smul.addr %s437, 32
      %s441 = sadd.s32 %s439, %s440
      %s442 = smul.addr %s441, 4
      %s443 = scalar_lea.vmem %s9, %s442
      %s444 = smul.u32 8, %s25
      %p445 = scmp.lt.s32.totalorder %s24, 1
      %s446 = scalar_select %p445, %s24, 1
      %p447 = scmp.lt.s32.totalorder %s444, 15
      %s448 = scalar_select %p447, %s444, 15
      %s449 = smul.addr %s448, 2
      %s450 = smul.addr %s446, 32
      %s451 = sadd.s32 %s449, %s450
      %s452 = smul.addr %s451, 4
      %s453 = scalar_lea.vmem %s0, %s452
      %s454 = smul.u32 8, %s25
      %s455 = smul.u32 %s25, 8
      %s456 = ssub.s32 %s455, 1
      %p457 = scmp.gt.s32.totalorder %s456, 0
      %s458 = scalar_select %p457, %s456, 0
      %p459 = scmp.lt.s32.totalorder %s24, 1
      %s460 = scalar_select %p459, %s24, 1
      %p461 = scmp.lt.s32.totalorder %s458, 15
      %s462 = scalar_select %p461, %s458, 15
      %s463 = smul.addr %s462, 2
      %s464 = smul.addr %s460, 32
      %s465 = sadd.s32 %s463, %s464
      %s466 = smul.addr %s465, 4
      %s467 = scalar_lea.vmem %s1, %s466
      %s468 = smul.u32 %s25, 8
      %s469 = ssub.s32 %s468, 1
      %p470 = scmp.gt.s32.totalorder %s469, 0
      %s471 = scalar_select %p470, %s469, 0
      %s472 = sadd.s32 %s25, 1
      %s473 = smul.u32 %s472, 8
      %p474 = scmp.lt.s32.totalorder %s473, 15
      %s475 = scalar_select %p474, %s473, 15
      %p476 = scmp.lt.s32.totalorder %s24, 1
      %s477 = scalar_select %p476, %s24, 1
      %p478 = scmp.lt.s32.totalorder %s475, 15
      %s479 = scalar_select %p478, %s475, 15
      %s480 = smul.addr %s479, 2
      %s481 = smul.addr %s477, 32
      %s482 = sadd.s32 %s480, %s481
      %s483 = smul.addr %s482, 4
      %s484 = scalar_lea.vmem %s2, %s483
      %s485 = sadd.s32 %s25, 1
      %s486 = smul.u32 %s485, 8
      %p487 = scmp.lt.s32.totalorder %s486, 15
      %s488 = scalar_select %p487, %s486, 15
      %s489 = smul.u32 16, %s25
      %p490 = scmp.lt.s32.totalorder %s24, 1
      %s491 = scalar_select %p490, %s24, 1
      %p492 = scmp.lt.s32.totalorder %s489, 31
      %s493 = scalar_select %p492, %s489, 31
      %s494 = smul.addr %s491, 32
      %s495 = sadd.s32 %s493, %s494
      %s496 = smul.addr %s495, 4
      %s497 = scalar_lea.vmem %s9, %s496
      %s498 = smul.u32 16, %s25
      %v500 = vld [vmem:[%s453] sm:$0xf]
      %v501 = vld [vmem:[%s453 + $0x4] sm:$0xf]
      %v502 = vld [vmem:[%s453 + $0x8] sm:$0xf]
      %v503 = vld [vmem:[%s453 + $0xc] sm:$0xf]
      %v504 = vld [vmem:[%s453 + $0x10] sm:$0xf]
      %v505 = vld [vmem:[%s453 + $0x14] sm:$0xf]
      %v506 = vld [vmem:[%s453 + $0x18] sm:$0xf]
      %v507 = vld [vmem:[%s453 + $0x1c] sm:$0xf]
      %v508 = vld [vmem:[%s453 + $0x20] sm:$0xf]
      %v509 = vld [vmem:[%s453 + $0x24] sm:$0xf]
      %v510 = vld [vmem:[%s453 + $0x28] sm:$0xf]
      %v511 = vld [vmem:[%s453 + $0x2c] sm:$0xf]
      %v512 = vld [vmem:[%s453 + $0x30] sm:$0xf]
      %v513 = vld [vmem:[%s453 + $0x34] sm:$0xf]
      %v514 = vld [vmem:[%s453 + $0x38] sm:$0xf]
      %v515 = vld [vmem:[%s453 + $0x3c] sm:$0xf]
      %v516 = vld [vmem:[%s467] sm:$0xf]
      %v517 = vld [vmem:[%s467 + $0x4] sm:$0xf]
      %v518 = vld [vmem:[%s484] sm:$0xf]
      %v519 = vld [vmem:[%s484 + $0x4] sm:$0xf]
      %v520 = vld [vmem:[%s3] sm:$0xf]
      %v521 = vld [vmem:[%s3 + $0x4] sm:$0xf]
      %v522 = vld [vmem:[%s4] sm:$0x1]
      %v524 = vlaneseq
      %v525 = vshrl.u32 %v524, 7
      %v526 = vsub.s32 0, %v525
      %v527 = vrot.slane %v522, %v526
      %v549 = vunpack.c.l.b16 %v516
      %v550 = vunpack.c.l.b16 %v517
      %v551 = vunpack.c.l.b16 %v500
      %v552 = vunpack.c.l.b16 %v501
      %v553 = vunpack.c.l.b16 %v502
      %v554 = vunpack.c.l.b16 %v503
      %v555 = vunpack.c.l.b16 %v504
      %v556 = vunpack.c.l.b16 %v505
      %v557 = vunpack.c.l.b16 %v506
      %v558 = vunpack.c.l.b16 %v507
      %v559 = vunpack.c.l.b16 %v508
      %v560 = vunpack.c.l.b16 %v509
      %v561 = vunpack.c.l.b16 %v510
      %v562 = vunpack.c.l.b16 %v511
      %v563 = vunpack.c.l.b16 %v512
      %v564 = vunpack.c.l.b16 %v513
      %v565 = vunpack.c.l.b16 %v514
      %v566 = vunpack.c.l.b16 %v515
      %v567 = vunpack.c.l.b16 %v518
      %v568 = vunpack.c.l.b16 %v519
      %v569 = vpack.c.b16 %v550, %v549
      %v570 = vpack.c.b16 %v552, %v551
      %v571 = vpack.c.b16 %v554, %v553
      %v572 = vpack.c.b16 %v556, %v555
      %v573 = vpack.c.b16 %v558, %v557
      %v574 = vpack.c.b16 %v560, %v559
      %v575 = vpack.c.b16 %v562, %v561
      %v576 = vpack.c.b16 %v564, %v563
      %v577 = vpack.c.b16 %v566, %v565
      %v578 = vpack.c.b16 %v568, %v567
      %v581 = vunpack.c.l.b16 %v520
      %v582 = vunpack.c.l.b16 %v521
      %v583 = vpack.c.b16 %v582, %v581
      %vm585 = vcmask 130048
      %v587 = vsel %vm585, %v569, 0
      %v590 = vsel %vm585, %v570, 0
      %v593 = vsel %vm585, %v571, 0
      %v596 = vsel %vm585, %v572, 0
      %v599 = vsel %vm585, %v573, 0
      %v602 = vsel %vm585, %v574, 0
      %v605 = vsel %vm585, %v575, 0
      %v608 = vsel %vm585, %v576, 0
      %v611 = vsel %vm585, %v577, 0
      %v614 = vsel %vm585, %v578, 0
      %616 = vmatprep.subr.bf16.mxu0 0
      %617 = vmatpush1.bf16.msra.mxu0 0
      %618 = vmatprep.subr.bf16.mxu0 0
      %619 = vmatpush1.bf16.msra.mxu0 0
      %620 = vmatprep.subr.bf16.mxu0 0
      %621 = vmatpush1.bf16.msra.mxu0 0
      %622 = vmatprep.subr.bf16.mxu0 0
      %623 = vmatpush1.bf16.msra.mxu0 0
      %624 = vmatprep.subr.bf16.mxu0 0
      %625 = vmatpush1.bf16.msra.mxu0 0
      %626 = vmatprep.subr.bf16.mxu0 0
      %627 = vmatpush1.bf16.msra.mxu0 0
      %628 = vmatprep.subr.bf16.mxu0 0
      %629 = vmatpush1.bf16.msra.mxu0 0
      %630 = vmatprep.subr.bf16.mxu0 0
      %631 = vmatpush1.bf16.msra.mxu0 %v583
      %632 = vmatprep.subr.bf16.mxu0 0
      %633 = vmatpush2.bf16.msra.mxu0 0
      %634 = vmatprep.subr.bf16.mxu0 0
      %635 = vmatpush2.bf16.msra.mxu0 0
      %636 = vmatprep.subr.bf16.mxu0 0
      %637 = vmatpush2.bf16.msra.mxu0 0
      %638 = vmatprep.subr.bf16.mxu0 0
      %639 = vmatpush2.bf16.msra.mxu0 0
      %640 = vmatprep.subr.bf16.mxu0 0
      %641 = vmatpush2.bf16.msra.mxu0 0
      %642 = vmatprep.subr.bf16.mxu0 0
      %643 = vmatpush2.bf16.msra.mxu0 0
      %644 = vmatprep.subr.bf16.mxu0 0
      %645 = vmatpush2.bf16.msra.mxu0 0
      %646 = vmatprep.subr.bf16.mxu0 0
      %647 = vmatpush2.bf16.msra.mxu0 0
      %648 = vmatprep.mubr.bf16.mxu0 0
      %649 = vmatmul.mubr.bf16.gmra.mxu0 %v587
      %v650 = vpop.f32.mrf.mxu0
      %v651 = vadd.f32 %v527, %v650
      %v652 = vpop.f32.mrf.mxu0
      %v653 = vpop.f32.mrf.mxu0
      %v654 = vadd.f32 %v527, %v653
      %v655 = vpop.f32.mrf.mxu0
      %656 = vmatprep.mubr.bf16.mxu0 0
      %657 = vmatmul.mubr.bf16.gmra.mxu0 %v590
      %v658 = vpop.f32.mrf.mxu0
      %v659 = vadd.f32 %v527, %v658
      %v660 = vpop.f32.mrf.mxu0
      %v661 = vpop.f32.mrf.mxu0
      %v662 = vadd.f32 %v527, %v661
      %v663 = vpop.f32.mrf.mxu0
      %664 = vmatprep.mubr.bf16.mxu0 0
      %665 = vmatmul.mubr.bf16.gmra.mxu0 %v593
      %v666 = vpop.f32.mrf.mxu0
      %v667 = vadd.f32 %v527, %v666
      %v668 = vpop.f32.mrf.mxu0
      %v669 = vpop.f32.mrf.mxu0
      %v670 = vadd.f32 %v527, %v669
      %v671 = vpop.f32.mrf.mxu0
      %672 = vmatprep.mubr.bf16.mxu0 0
      %673 = vmatmul.mubr.bf16.gmra.mxu0 %v596
      %v674 = vpop.f32.mrf.mxu0
      %v675 = vadd.f32 %v527, %v674
      %v676 = vpop.f32.mrf.mxu0
      %v677 = vpop.f32.mrf.mxu0
      %v678 = vadd.f32 %v527, %v677
      %v679 = vpop.f32.mrf.mxu0
      %680 = vmatprep.mubr.bf16.mxu0 0
      %681 = vmatmul.mubr.bf16.gmra.mxu0 %v599
      %v682 = vpop.f32.mrf.mxu0
      %v683 = vadd.f32 %v527, %v682
      %v684 = vpop.f32.mrf.mxu0
      %v685 = vpop.f32.mrf.mxu0
      %v686 = vadd.f32 %v527, %v685
      %v687 = vpop.f32.mrf.mxu0
      %688 = vmatprep.mubr.bf16.mxu0 0
      %689 = vmatmul.mubr.bf16.gmra.mxu0 %v602
      %v690 = vpop.f32.mrf.mxu0
      %v691 = vadd.f32 %v527, %v690
      %v692 = vpop.f32.mrf.mxu0
      %v693 = vpop.f32.mrf.mxu0
      %v694 = vadd.f32 %v527, %v693
      %v695 = vpop.f32.mrf.mxu0
      %696 = vmatprep.mubr.bf16.mxu0 0
      %697 = vmatmul.mubr.bf16.gmra.mxu0 %v605
      %v698 = vpop.f32.mrf.mxu0
      %v699 = vadd.f32 %v527, %v698
      %v700 = vpop.f32.mrf.mxu0
      %v701 = vpop.f32.mrf.mxu0
      %v702 = vadd.f32 %v527, %v701
      %v703 = vpop.f32.mrf.mxu0
      %704 = vmatprep.mubr.bf16.mxu0 0
      %705 = vmatmul.mubr.bf16.gmra.mxu0 %v608
      %v706 = vpop.f32.mrf.mxu0
      %v707 = vadd.f32 %v527, %v706
      %v708 = vpop.f32.mrf.mxu0
      %v709 = vpop.f32.mrf.mxu0
      %v710 = vadd.f32 %v527, %v709
      %v711 = vpop.f32.mrf.mxu0
      %712 = vmatprep.mubr.bf16.mxu0 0
      %713 = vmatmul.mubr.bf16.gmra.mxu0 %v611
      %v714 = vpop.f32.mrf.mxu0
      %v715 = vadd.f32 %v527, %v714
      %v716 = vpop.f32.mrf.mxu0
      %v717 = vpop.f32.mrf.mxu0
      %v718 = vadd.f32 %v527, %v717
      %v719 = vpop.f32.mrf.mxu0
      %720 = vmatprep.mubr.bf16.mxu0 0
      %721 = vmatmul.mubr.bf16.gmra.mxu0 %v614
      %v722 = vpop.f32.mrf.mxu0
      %v723 = vadd.f32 %v527, %v722
      %v724 = vpop.f32.mrf.mxu0
      %v725 = vpop.f32.mrf.mxu0
      %v726 = vadd.f32 %v527, %v725
      %v727 = vpop.f32.mrf.mxu0
      %728 = vdwg.mxu0
      %v729 = vmax.f32 %v651, 0.0
      %v730 = vmax.f32 %v654, 0.0
      %v731 = vmax.f32 %v659, 0.0
      %v732 = vmax.f32 %v662, 0.0
      %v733 = vmax.f32 %v667, 0.0
      %v734 = vmax.f32 %v670, 0.0
      %v735 = vmax.f32 %v675, 0.0
      %v736 = vmax.f32 %v678, 0.0
      %v737 = vmax.f32 %v683, 0.0
      %v738 = vmax.f32 %v686, 0.0
      %v739 = vmax.f32 %v691, 0.0
      %v740 = vmax.f32 %v694, 0.0
      %v741 = vmax.f32 %v699, 0.0
      %v742 = vmax.f32 %v702, 0.0
      %v743 = vmax.f32 %v707, 0.0
      %v744 = vmax.f32 %v710, 0.0
      %v745 = vmax.f32 %v715, 0.0
      %v746 = vmax.f32 %v718, 0.0
      %v747 = vmax.f32 %v723, 0.0
      %v748 = vmax.f32 %v726, 0.0
      %p749 = scmp.gt.s32.totalorder %s25, 0
      %s750 = scalar_select %p749, 1, 0
      %v751 = vstv %s750
      %vm752 = vcmp.eq.s32.totalorder %v751, 1
      %p753 = scmp.lt.s32.totalorder %s25, 1
      %s754 = scalar_select %p753, 1, 0
      %v755 = vstv %s754
      %vm756 = vcmp.eq.s32.totalorder %v755, 1
      %v757 = vsel %vm752, 1, 0
      %v758 = vsel %vm756, 1, 0
      %vm759 = vcmp.eq.s32.totalorder %v757, 1
      %vm760 = vcmp.eq.s32.totalorder %v758, 1
      %v761 = vsel %vm759, %v729, 0.0
      %v762 = vsel %vm759, %v730, 0.0
      %v763 = vsel 1, %v731, 0.0
      %v764 = vsel 1, %v732, 0.0
      %v765 = vsel 1, %v733, 0.0
      %v766 = vsel 1, %v734, 0.0
      %v767 = vsel 1, %v735, 0.0
      %v768 = vsel 1, %v736, 0.0
      %v769 = vsel 1, %v737, 0.0
      %v770 = vsel 1, %v738, 0.0
      %v771 = vsel 1, %v739, 0.0
      %v772 = vsel 1, %v740, 0.0
      %v773 = vsel 1, %v741, 0.0
      %v774 = vsel 1, %v742, 0.0
      %v775 = vsel 1, %v743, 0.0
      %v776 = vsel 1, %v744, 0.0
      %v777 = vsel 1, %v745, 0.0
      %v778 = vsel 1, %v746, 0.0
      %v779 = vsel %vm760, %v747, 0.0
      %v780 = vsel %vm760, %v748, 0.0
      %v781 = vpack.c.bf16 %v762, %v761
      %v782 = vpack.c.bf16 %v764, %v763
      %v783 = vpack.c.bf16 %v766, %v765
      %v784 = vpack.c.bf16 %v768, %v767
      %v785 = vpack.c.bf16 %v770, %v769
      %v786 = vpack.c.bf16 %v772, %v771
      %v787 = vpack.c.bf16 %v774, %v773
      %v788 = vpack.c.bf16 %v776, %v775
      %v789 = vpack.c.bf16 %v778, %v777
      %v790 = vpack.c.bf16 %v780, %v779
      %v792 = vshrl.u32 %v781, 16
      %v794 = vrot.slane %v792, 7
      %v795 = vshll.u32 %v781, 16
      %v797 = vor.u32 %v794, %v795
      %v799 = vshrl.u32 %v782, 16
      %v801 = vrot.slane %v799, 7
      %v802 = vshll.u32 %v782, 16
      %v804 = vor.u32 %v801, %v802
      %v806 = vshrl.u32 %v783, 16
      %v808 = vrot.slane %v806, 7
      %v809 = vshll.u32 %v783, 16
      %v811 = vor.u32 %v808, %v809
      %v813 = vshrl.u32 %v784, 16
      %v815 = vrot.slane %v813, 7
      %v816 = vshll.u32 %v784, 16
      %v818 = vor.u32 %v815, %v816
      %v820 = vshrl.u32 %v785, 16
      %v822 = vrot.slane %v820, 7
      %v823 = vshll.u32 %v785, 16
      %v825 = vor.u32 %v822, %v823
      %v827 = vshrl.u32 %v786, 16
      %v829 = vrot.slane %v827, 7
      %v830 = vshll.u32 %v786, 16
      %v832 = vor.u32 %v829, %v830
      %v834 = vshrl.u32 %v787, 16
      %v836 = vrot.slane %v834, 7
      %v837 = vshll.u32 %v787, 16
      %v839 = vor.u32 %v836, %v837
      %v841 = vshrl.u32 %v788, 16
      %v843 = vrot.slane %v841, 7
      %v844 = vshll.u32 %v788, 16
      %v846 = vor.u32 %v843, %v844
      %v848 = vshrl.u32 %v789, 16
      %v850 = vrot.slane %v848, 7
      %v851 = vshll.u32 %v789, 16
      %v853 = vor.u32 %v850, %v851
      %v855 = vshrl.u32 %v790, 16
      %v857 = vrot.slane %v855, 7
      %v858 = vshll.u32 %v790, 16
      %v860 = vor.u32 %v857, %v858
      %vm881 = vcmask 1040384
      %vm882 = vsmask.f32 256
      %vm883 = vmand %vm881, %vm882
      %v884 = vsel %vm883, 0, %v797
      %v885 = vsel %vm883, 0, %v804
      %v886 = vsel %vm883, 0, %v811
      %v887 = vsel %vm883, 0, %v818
      %v888 = vsel %vm883, 0, %v825
      %v889 = vsel %vm883, 0, %v832
      %v890 = vsel %vm883, 0, %v839
      %v891 = vsel %vm883, 0, %v846
      %v892 = vsel %vm883, 0, %v853
      %v893 = vsel %vm883, 0, %v860
      %v894 = vsel %vm883, %v794, 0
      %v895 = vsel %vm883, %v801, 0
      %v896 = vsel %vm883, %v808, 0
      %v897 = vsel %vm883, %v815, 0
      %v898 = vsel %vm883, %v822, 0
      %v899 = vsel %vm883, %v829, 0
      %v900 = vsel %vm883, %v836, 0
      %v901 = vsel %vm883, %v843, 0
      %v902 = vsel %vm883, %v850, 0
      %v903 = vsel %vm883, %v857, 0
      %vm904 = vsmask.f32 7424
      %v906 = vshrl.u32 %v884, 16
      %v908 = vshll.u32 %v884, 16
      %v910 = vrot.slane %v908, 1
      %v911 = vor.u32 %v906, %v910
      %v913 = vshll.u32 %v894, 16
      %v915 = vrot.slane %v913, 1
      %v916 = vsel %vm904, %v911, %v915
      %v918 = vshrl.u32 %v885, 16
      %v920 = vshll.u32 %v885, 16
      %v922 = vrot.slane %v920, 1
      %v923 = vor.u32 %v918, %v922
      %v925 = vshll.u32 %v895, 16
      %v927 = vrot.slane %v925, 1
      %v928 = vsel %vm904, %v923, %v927
      %v930 = vshrl.u32 %v886, 16
      %v932 = vshll.u32 %v886, 16
      %v934 = vrot.slane %v932, 1
      %v935 = vor.u32 %v930, %v934
      %v937 = vshll.u32 %v896, 16
      %v939 = vrot.slane %v937, 1
      %v940 = vsel %vm904, %v935, %v939
      %v942 = vshrl.u32 %v887, 16
      %v944 = vshll.u32 %v887, 16
      %v946 = vrot.slane %v944, 1
      %v947 = vor.u32 %v942, %v946
      %v949 = vshll.u32 %v897, 16
      %v951 = vrot.slane %v949, 1
      %v952 = vsel %vm904, %v947, %v951
      %v954 = vshrl.u32 %v888, 16
      %v956 = vshll.u32 %v888, 16
      %v958 = vrot.slane %v956, 1
      %v959 = vor.u32 %v954, %v958
      %v961 = vshll.u32 %v898, 16
      %v963 = vrot.slane %v961, 1
      %v964 = vsel %vm904, %v959, %v963
      %v966 = vshrl.u32 %v889, 16
      %v968 = vshll.u32 %v889, 16
      %v970 = vrot.slane %v968, 1
      %v971 = vor.u32 %v966, %v970
      %v973 = vshll.u32 %v899, 16
      %v975 = vrot.slane %v973, 1
      %v976 = vsel %vm904, %v971, %v975
      %v978 = vshrl.u32 %v890, 16
      %v980 = vshll.u32 %v890, 16
      %v982 = vrot.slane %v980, 1
      %v983 = vor.u32 %v978, %v982
      %v985 = vshll.u32 %v900, 16
      %v987 = vrot.slane %v985, 1
      %v988 = vsel %vm904, %v983, %v987
      %v990 = vshrl.u32 %v891, 16
      %v992 = vshll.u32 %v891, 16
      %v994 = vrot.slane %v992, 1
      %v995 = vor.u32 %v990, %v994
      %v997 = vshll.u32 %v901, 16
      %v999 = vrot.slane %v997, 1
      %v1000 = vsel %vm904, %v995, %v999
      %1001 = vrot.lane.b32.xlu0 %v916, 4
      %v1002 = vpop.permute.xlu0 %1001
      %1003 = vrot.lane.b32.xlu0 %v928, 4
      %v1004 = vpop.permute.xlu0 %1003
      %1005 = vrot.lane.b32.xlu0 %v940, 4
      %v1006 = vpop.permute.xlu0 %1005
      %1007 = vrot.lane.b32.xlu0 %v952, 4
      %v1008 = vpop.permute.xlu0 %1007
      %1009 = vrot.lane.b32.xlu0 %v964, 4
      %v1010 = vpop.permute.xlu0 %1009
      %1011 = vrot.lane.b32.xlu0 %v976, 4
      %v1012 = vpop.permute.xlu0 %1011
      %1013 = vrot.lane.b32.xlu0 %v988, 4
      %v1014 = vpop.permute.xlu0 %1013
      %1015 = vrot.lane.b32.xlu0 %v1000, 4
      %v1016 = vpop.permute.xlu0 %1015
      %vm1033 = vcmask 1046528
      %v1034 = vrot.slane %v884, 1
      %v1035 = vrot.slane %v894, 1
      %v1036 = vsel %vm1033, %v1034, %v1035
      %v1037 = vrot.slane %v885, 1
      %v1038 = vrot.slane %v895, 1
      %v1039 = vsel %vm1033, %v1037, %v1038
      %v1040 = vrot.slane %v886, 1
      %v1041 = vrot.slane %v896, 1
      %v1042 = vsel %vm1033, %v1040, %v1041
      %v1043 = vrot.slane %v887, 1
      %v1044 = vrot.slane %v897, 1
      %v1045 = vsel %vm1033, %v1043, %v1044
      %v1046 = vrot.slane %v888, 1
      %v1047 = vrot.slane %v898, 1
      %v1048 = vsel %vm1033, %v1046, %v1047
      %v1049 = vrot.slane %v889, 1
      %v1050 = vrot.slane %v899, 1
      %v1051 = vsel %vm1033, %v1049, %v1050
      %v1052 = vrot.slane %v890, 1
      %v1053 = vrot.slane %v900, 1
      %v1054 = vsel %vm1033, %v1052, %v1053
      %v1055 = vrot.slane %v891, 1
      %v1056 = vrot.slane %v901, 1
      %v1057 = vsel %vm1033, %v1055, %v1056
      %1058 = vrot.lane.b32.xlu0 %v1036, 8
      %v1059 = vpop.permute.xlu0 %1058
      %1060 = vrot.lane.b32.xlu0 %v1039, 8
      %v1061 = vpop.permute.xlu0 %1060
      %1062 = vrot.lane.b32.xlu0 %v1042, 8
      %v1063 = vpop.permute.xlu0 %1062
      %1064 = vrot.lane.b32.xlu0 %v1045, 8
      %v1065 = vpop.permute.xlu0 %1064
      %1066 = vrot.lane.b32.xlu0 %v1048, 8
      %v1067 = vpop.permute.xlu0 %1066
      %1068 = vrot.lane.b32.xlu0 %v1051, 8
      %v1069 = vpop.permute.xlu0 %1068
      %1070 = vrot.lane.b32.xlu0 %v1054, 8
      %v1071 = vpop.permute.xlu0 %1070
      %1072 = vrot.lane.b32.xlu0 %v1057, 8
      %v1073 = vpop.permute.xlu0 %1072
      %1075 = vrot.lane.b32.xlu0 %v885, 12
      %v1076 = vpop.permute.xlu0 %1075
      %1077 = vrot.lane.b32.xlu0 %v886, 12
      %v1078 = vpop.permute.xlu0 %1077
      %1079 = vrot.lane.b32.xlu0 %v887, 12
      %v1080 = vpop.permute.xlu0 %1079
      %1081 = vrot.lane.b32.xlu0 %v888, 12
      %v1082 = vpop.permute.xlu0 %1081
      %1083 = vrot.lane.b32.xlu0 %v889, 12
      %v1084 = vpop.permute.xlu0 %1083
      %1085 = vrot.lane.b32.xlu0 %v890, 12
      %v1086 = vpop.permute.xlu0 %1085
      %1087 = vrot.lane.b32.xlu0 %v891, 12
      %v1088 = vpop.permute.xlu0 %1087
      %1089 = vrot.lane.b32.xlu0 %v892, 12
      %v1090 = vpop.permute.xlu0 %1089
      %v1092 = vshrl.u32 %v892, 16
      %v1094 = vshll.u32 %v892, 16
      %v1096 = vrot.slane %v1094, 1
      %v1097 = vor.u32 %v1092, %v1096
      %v1099 = vshll.u32 %v902, 16
      %v1101 = vrot.slane %v1099, 1
      %v1102 = vsel %vm904, %v1097, %v1101
      %1103 = vrot.lane.b32.xlu0 %v928, 16
      %v1104 = vpop.permute.xlu0 %1103
      %1105 = vrot.lane.b32.xlu0 %v940, 16
      %v1106 = vpop.permute.xlu0 %1105
      %1107 = vrot.lane.b32.xlu0 %v952, 16
      %v1108 = vpop.permute.xlu0 %1107
      %1109 = vrot.lane.b32.xlu0 %v964, 16
      %v1110 = vpop.permute.xlu0 %1109
      %1111 = vrot.lane.b32.xlu0 %v976, 16
      %v1112 = vpop.permute.xlu0 %1111
      %1113 = vrot.lane.b32.xlu0 %v988, 16
      %v1114 = vpop.permute.xlu0 %1113
      %1115 = vrot.lane.b32.xlu0 %v1000, 16
      %v1116 = vpop.permute.xlu0 %1115
      %1117 = vrot.lane.b32.xlu0 %v1102, 16
      %v1118 = vpop.permute.xlu0 %1117
      %v1120 = vrot.slane %v892, 1
      %v1121 = vrot.slane %v902, 1
      %v1122 = vsel %vm1033, %v1120, %v1121
      %1123 = vrot.lane.b32.xlu0 %v1039, 20
      %v1124 = vpop.permute.xlu0 %1123
      %1125 = vrot.lane.b32.xlu0 %v1042, 20
      %v1126 = vpop.permute.xlu0 %1125
      %1127 = vrot.lane.b32.xlu0 %v1045, 20
      %v1128 = vpop.permute.xlu0 %1127
      %1129 = vrot.lane.b32.xlu0 %v1048, 20
      %v1130 = vpop.permute.xlu0 %1129
      %1131 = vrot.lane.b32.xlu0 %v1051, 20
      %v1132 = vpop.permute.xlu0 %1131
      %1133 = vrot.lane.b32.xlu0 %v1054, 20
      %v1134 = vpop.permute.xlu0 %1133
      %1135 = vrot.lane.b32.xlu0 %v1057, 20
      %v1136 = vpop.permute.xlu0 %1135
      %1137 = vrot.lane.b32.xlu0 %v1122, 20
      %v1138 = vpop.permute.xlu0 %1137
      %1140 = vrot.lane.b32.xlu0 %v886, 24
      %v1141 = vpop.permute.xlu0 %1140
      %1142 = vrot.lane.b32.xlu0 %v887, 24
      %v1143 = vpop.permute.xlu0 %1142
      %1144 = vrot.lane.b32.xlu0 %v888, 24
      %v1145 = vpop.permute.xlu0 %1144
      %1146 = vrot.lane.b32.xlu0 %v889, 24
      %v1147 = vpop.permute.xlu0 %1146
      %1148 = vrot.lane.b32.xlu0 %v890, 24
      %v1149 = vpop.permute.xlu0 %1148
      %1150 = vrot.lane.b32.xlu0 %v891, 24
      %v1151 = vpop.permute.xlu0 %1150
      %1152 = vrot.lane.b32.xlu0 %v892, 24
      %v1153 = vpop.permute.xlu0 %1152
      %1154 = vrot.lane.b32.xlu0 %v893, 24
      %v1155 = vpop.permute.xlu0 %1154
      %v1157 = vshrl.u32 %v893, 16
      %v1159 = vshll.u32 %v893, 16
      %v1161 = vrot.slane %v1159, 1
      %v1162 = vor.u32 %v1157, %v1161
      %v1164 = vshll.u32 %v903, 16
      %v1166 = vrot.slane %v1164, 1
      %v1167 = vsel %vm904, %v1162, %v1166
      %1168 = vrot.lane.b32.xlu0 %v940, 28
      %v1169 = vpop.permute.xlu0 %1168
      %1170 = vrot.lane.b32.xlu0 %v952, 28
      %v1171 = vpop.permute.xlu0 %1170
      %1172 = vrot.lane.b32.xlu0 %v964, 28
      %v1173 = vpop.permute.xlu0 %1172
      %1174 = vrot.lane.b32.xlu0 %v976, 28
      %v1175 = vpop.permute.xlu0 %1174
      %1176 = vrot.lane.b32.xlu0 %v988, 28
      %v1177 = vpop.permute.xlu0 %1176
      %1178 = vrot.lane.b32.xlu0 %v1000, 28
      %v1179 = vpop.permute.xlu0 %1178
      %1180 = vrot.lane.b32.xlu0 %v1102, 28
      %v1181 = vpop.permute.xlu0 %1180
      %1182 = vrot.lane.b32.xlu0 %v1167, 28
      %v1183 = vpop.permute.xlu0 %1182
      %v1185 = vrot.slane %v893, 1
      %v1186 = vrot.slane %v903, 1
      %v1187 = vsel %vm1033, %v1185, %v1186
      %1188 = vrot.lane.b32.xlu0 %v1042, 32
      %v1189 = vpop.permute.xlu0 %1188
      %1190 = vrot.lane.b32.xlu0 %v1045, 32
      %v1191 = vpop.permute.xlu0 %1190
      %1192 = vrot.lane.b32.xlu0 %v1048, 32
      %v1193 = vpop.permute.xlu0 %1192
      %1194 = vrot.lane.b32.xlu0 %v1051, 32
      %v1195 = vpop.permute.xlu0 %1194
      %1196 = vrot.lane.b32.xlu0 %v1054, 32
      %v1197 = vpop.permute.xlu0 %1196
      %1198 = vrot.lane.b32.xlu0 %v1057, 32
      %v1199 = vpop.permute.xlu0 %1198
      %1200 = vrot.lane.b32.xlu0 %v1122, 32
      %v1201 = vpop.permute.xlu0 %1200
      %1202 = vrot.lane.b32.xlu0 %v1187, 32
      %v1203 = vpop.permute.xlu0 %1202
      %vm1204 = vcmask 31744
      %v1206 = vsel %vm1204, %v884, %v1002
      %v1208 = vsel %vm1204, %v885, %v1004
      %v1210 = vsel %vm1204, %v886, %v1006
      %v1212 = vsel %vm1204, %v887, %v1008
      %v1214 = vsel %vm1204, %v888, %v1010
      %v1216 = vsel %vm1204, %v889, %v1012
      %v1218 = vsel %vm1204, %v890, %v1014
      %v1220 = vsel %vm1204, %v891, %v1016
      %vm1221 = vcmask 64512
      %v1223 = vsel %vm1221, %v1206, %v1059
      %v1225 = vsel %vm1221, %v1208, %v1061
      %v1227 = vsel %vm1221, %v1210, %v1063
      %v1229 = vsel %vm1221, %v1212, %v1065
      %v1231 = vsel %vm1221, %v1214, %v1067
      %v1233 = vsel %vm1221, %v1216, %v1069
      %v1235 = vsel %vm1221, %v1218, %v1071
      %v1237 = vsel %vm1221, %v1220, %v1073
      %vm1238 = vcmask 97280
      %v1240 = vsel %vm1238, %v1223, %v1076
      %v1242 = vsel %vm1238, %v1225, %v1078
      %v1244 = vsel %vm1238, %v1227, %v1080
      %v1246 = vsel %vm1238, %v1229, %v1082
      %v1248 = vsel %vm1238, %v1231, %v1084
      %v1250 = vsel %vm1238, %v1233, %v1086
      %v1252 = vsel %vm1238, %v1235, %v1088
      %v1254 = vsel %vm1238, %v1237, %v1090
      %v1256 = vsel %vm585, %v1240, %v1104
      %v1258 = vsel %vm585, %v1242, %v1106
      %v1260 = vsel %vm585, %v1244, %v1108
      %v1262 = vsel %vm585, %v1246, %v1110
      %v1264 = vsel %vm585, %v1248, %v1112
      %v1266 = vsel %vm585, %v1250, %v1114
      %v1268 = vsel %vm585, %v1252, %v1116
      %v1270 = vsel %vm585, %v1254, %v1118
      %vm1271 = vcmask 162816
      %v1273 = vsel %vm1271, %v1256, %v1124
      %v1275 = vsel %vm1271, %v1258, %v1126
      %v1277 = vsel %vm1271, %v1260, %v1128
      %v1279 = vsel %vm1271, %v1262, %v1130
      %v1281 = vsel %vm1271, %v1264, %v1132
      %v1283 = vsel %vm1271, %v1266, %v1134
      %v1285 = vsel %vm1271, %v1268, %v1136
      %v1287 = vsel %vm1271, %v1270, %v1138
      %vm1288 = vcmask 195584
      %v1290 = vsel %vm1288, %v1273, %v1141
      %v1292 = vsel %vm1288, %v1275, %v1143
      %v1294 = vsel %vm1288, %v1277, %v1145
      %v1296 = vsel %vm1288, %v1279, %v1147
      %v1298 = vsel %vm1288, %v1281, %v1149
      %v1300 = vsel %vm1288, %v1283, %v1151
      %v1302 = vsel %vm1288, %v1285, %v1153
      %v1304 = vsel %vm1288, %v1287, %v1155
      %vm1305 = vcmask 228352
      %v1307 = vsel %vm1305, %v1290, %v1169
      %v1309 = vsel %vm1305, %v1292, %v1171
      %v1311 = vsel %vm1305, %v1294, %v1173
      %v1313 = vsel %vm1305, %v1296, %v1175
      %v1315 = vsel %vm1305, %v1298, %v1177
      %v1317 = vsel %vm1305, %v1300, %v1179
      %v1319 = vsel %vm1305, %v1302, %v1181
      %v1321 = vsel %vm1305, %v1304, %v1183
      %vm1322 = vcmask 261120
      %v1324 = vsel %vm1322, %v1307, %v1189
      %v1326 = vsel %vm1322, %v1309, %v1191
      %v1328 = vsel %vm1322, %v1311, %v1193
      %v1330 = vsel %vm1322, %v1313, %v1195
      %v1332 = vsel %vm1322, %v1315, %v1197
      %v1334 = vsel %vm1322, %v1317, %v1199
      %v1336 = vsel %vm1322, %v1319, %v1201
      %v1338 = vsel %vm1322, %v1321, %v1203
      %v1339 = vld [vmem:[%s5] sm:$0xf]
      %v1340 = vld [vmem:[%s5 + $0x4] sm:$0xf]
      %v1341 = vld [vmem:[%s5 + $0x8] sm:$0xf]
      %v1342 = vld [vmem:[%s5 + $0xc] sm:$0xf]
      %v1343 = vld [vmem:[%s5 + $0x10] sm:$0x3]
      %v1344 = vld [vmem:[%s6] sm:$0x1]
      %v1346 = vlaneseq
      %v1347 = vshrl.u32 %v1346, 7
      %v1348 = vsub.s32 0, %v1347
      %v1349 = vrot.slane %v1344, %v1348
      %v1356 = vunpack.c.l.b16 %v1339
      %v1357 = vunpack.c.l.b16 %v1340
      %v1358 = vunpack.c.l.b16 %v1341
      %v1359 = vunpack.c.l.b16 %v1342
      %v1360 = vunpack.c.l.b16 %v1343
      %v1361 = vpack.c.b16 %v1357, %v1356
      %v1362 = vpack.c.b16 %v1359, %v1358
      %v1363 = vpack.c.b16 %v1360, %v1360
      %vm1366 = vcmask 293888
      %v1367 = vsel %vm1366, %v1324, 0
      %v1369 = vsel %vm1366, %v1326, 0
      %v1371 = vsel %vm1366, %v1328, 0
      %v1373 = vsel %vm1366, %v1330, 0
      %v1375 = vsel %vm1366, %v1332, 0
      %v1377 = vsel %vm1366, %v1334, 0
      %v1379 = vsel %vm1366, %v1336, 0
      %v1381 = vsel %vm1366, %v1338, 0
      %vm1383 = vcmask 1041408
      %v1385 = vsel %vm1383, %v1363, 0
      %1387 = vmatprep.subr.bf16.mxu0 0
      %1388 = vmatpush1.bf16.msra.mxu0 0
      %1389 = vmatprep.subr.bf16.mxu0 0
      %1390 = vmatpush1.bf16.msra.mxu0 0
      %1391 = vmatprep.subr.bf16.mxu0 0
      %1392 = vmatpush1.bf16.msra.mxu0 0
      %1393 = vmatprep.subr.bf16.mxu0 0
      %1394 = vmatpush1.bf16.msra.mxu0 0
      %1395 = vmatprep.subr.bf16.mxu0 0
      %1396 = vmatpush1.bf16.msra.mxu0 0
      %1397 = vmatprep.subr.bf16.mxu0 0
      %1398 = vmatpush1.bf16.msra.mxu0 %v1385
      %1399 = vmatprep.subr.bf16.mxu0 0
      %1400 = vmatpush1.bf16.msra.mxu0 %v1362
      %1401 = vmatprep.subr.bf16.mxu0 0
      %1402 = vmatpush1.bf16.msra.mxu0 %v1361
      %1403 = vmatprep.subr.bf16.mxu0 0
      %1404 = vmatpush2.bf16.msra.mxu0 0
      %1405 = vmatprep.subr.bf16.mxu0 0
      %1406 = vmatpush2.bf16.msra.mxu0 0
      %1407 = vmatprep.subr.bf16.mxu0 0
      %1408 = vmatpush2.bf16.msra.mxu0 0
      %1409 = vmatprep.subr.bf16.mxu0 0
      %1410 = vmatpush2.bf16.msra.mxu0 0
      %1411 = vmatprep.subr.bf16.mxu0 0
      %1412 = vmatpush2.bf16.msra.mxu0 0
      %1413 = vmatprep.subr.bf16.mxu0 0
      %1414 = vmatpush2.bf16.msra.mxu0 0
      %1415 = vmatprep.subr.bf16.mxu0 0
      %1416 = vmatpush2.bf16.msra.mxu0 0
      %1417 = vmatprep.subr.bf16.mxu0 0
      %1418 = vmatpush2.bf16.msra.mxu0 0
      %1419 = vmatprep.mubr.bf16.mxu0 0
      %1420 = vmatmul.mubr.bf16.gmra.mxu0 %v1367
      %v1421 = vpop.f32.mrf.mxu0
      %v1422 = vadd.f32 %v1349, %v1421
      %v1423 = vpop.f32.mrf.mxu0
      %v1424 = vpop.f32.mrf.mxu0
      %v1425 = vadd.f32 %v1349, %v1424
      %v1426 = vpop.f32.mrf.mxu0
      %1427 = vmatprep.mubr.bf16.mxu0 0
      %1428 = vmatmul.mubr.bf16.gmra.mxu0 %v1369
      %v1429 = vpop.f32.mrf.mxu0
      %v1430 = vadd.f32 %v1349, %v1429
      %v1431 = vpop.f32.mrf.mxu0
      %v1432 = vpop.f32.mrf.mxu0
      %v1433 = vadd.f32 %v1349, %v1432
      %v1434 = vpop.f32.mrf.mxu0
      %1435 = vmatprep.mubr.bf16.mxu0 0
      %1436 = vmatmul.mubr.bf16.gmra.mxu0 %v1371
      %v1437 = vpop.f32.mrf.mxu0
      %v1438 = vadd.f32 %v1349, %v1437
      %v1439 = vpop.f32.mrf.mxu0
      %v1440 = vpop.f32.mrf.mxu0
      %v1441 = vadd.f32 %v1349, %v1440
      %v1442 = vpop.f32.mrf.mxu0
      %1443 = vmatprep.mubr.bf16.mxu0 0
      %1444 = vmatmul.mubr.bf16.gmra.mxu0 %v1373
      %v1445 = vpop.f32.mrf.mxu0
      %v1446 = vadd.f32 %v1349, %v1445
      %v1447 = vpop.f32.mrf.mxu0
      %v1448 = vpop.f32.mrf.mxu0
      %v1449 = vadd.f32 %v1349, %v1448
      %v1450 = vpop.f32.mrf.mxu0
      %1451 = vmatprep.mubr.bf16.mxu0 0
      %1452 = vmatmul.mubr.bf16.gmra.mxu0 %v1375
      %v1453 = vpop.f32.mrf.mxu0
      %v1454 = vadd.f32 %v1349, %v1453
      %v1455 = vpop.f32.mrf.mxu0
      %v1456 = vpop.f32.mrf.mxu0
      %v1457 = vadd.f32 %v1349, %v1456
      %v1458 = vpop.f32.mrf.mxu0
      %1459 = vmatprep.mubr.bf16.mxu0 0
      %1460 = vmatmul.mubr.bf16.gmra.mxu0 %v1377
      %v1461 = vpop.f32.mrf.mxu0
      %v1462 = vadd.f32 %v1349, %v1461
      %v1463 = vpop.f32.mrf.mxu0
      %v1464 = vpop.f32.mrf.mxu0
      %v1465 = vadd.f32 %v1349, %v1464
      %v1466 = vpop.f32.mrf.mxu0
      %1467 = vmatprep.mubr.bf16.mxu0 0
      %1468 = vmatmul.mubr.bf16.gmra.mxu0 %v1379
      %v1469 = vpop.f32.mrf.mxu0
      %v1470 = vadd.f32 %v1349, %v1469
      %v1471 = vpop.f32.mrf.mxu0
      %v1472 = vpop.f32.mrf.mxu0
      %v1473 = vadd.f32 %v1349, %v1472
      %v1474 = vpop.f32.mrf.mxu0
      %1475 = vmatprep.mubr.bf16.mxu0 0
      %1476 = vmatmul.mubr.bf16.gmra.mxu0 %v1381
      %v1477 = vpop.f32.mrf.mxu0
      %v1478 = vadd.f32 %v1349, %v1477
      %v1479 = vpop.f32.mrf.mxu0
      %v1480 = vpop.f32.mrf.mxu0
      %v1481 = vadd.f32 %v1349, %v1480
      %v1482 = vpop.f32.mrf.mxu0
      %1483 = vdwg.mxu0
      %v1484 = vmax.f32 %v1422, 0.0
      %v1485 = vmax.f32 %v1425, 0.0
      %v1486 = vmax.f32 %v1430, 0.0
      %v1487 = vmax.f32 %v1433, 0.0
      %v1488 = vmax.f32 %v1438, 0.0
      %v1489 = vmax.f32 %v1441, 0.0
      %v1490 = vmax.f32 %v1446, 0.0
      %v1491 = vmax.f32 %v1449, 0.0
      %v1492 = vmax.f32 %v1454, 0.0
      %v1493 = vmax.f32 %v1457, 0.0
      %v1494 = vmax.f32 %v1462, 0.0
      %v1495 = vmax.f32 %v1465, 0.0
      %v1496 = vmax.f32 %v1470, 0.0
      %v1497 = vmax.f32 %v1473, 0.0
      %v1498 = vmax.f32 %v1478, 0.0
      %v1499 = vmax.f32 %v1481, 0.0
      %v1500 = vpack.c.bf16 %v1485, %v1484
      %v1501 = vpack.c.bf16 %v1487, %v1486
      %v1502 = vpack.c.bf16 %v1489, %v1488
      %v1503 = vpack.c.bf16 %v1491, %v1490
      %v1504 = vpack.c.bf16 %v1493, %v1492
      %v1505 = vpack.c.bf16 %v1495, %v1494
      %v1506 = vpack.c.bf16 %v1497, %v1496
      %v1507 = vpack.c.bf16 %v1499, %v1498
      %v1508 = vld [vmem:[%s7] sm:$0x3]
      %v1509 = vunpack.c.l.bf16 %v500
      %v1510 = vunpack.c.l.bf16 %v501
      %v1511 = vunpack.c.l.bf16 %v502
      %v1512 = vunpack.c.l.bf16 %v503
      %v1513 = vunpack.c.l.bf16 %v504
      %v1514 = vunpack.c.l.bf16 %v505
      %v1515 = vunpack.c.l.bf16 %v506
      %v1516 = vunpack.c.l.bf16 %v507
      %v1517 = vunpack.c.l.bf16 %v508
      %v1518 = vunpack.c.l.bf16 %v509
      %v1519 = vunpack.c.l.bf16 %v510
      %v1520 = vunpack.c.l.bf16 %v511
      %v1521 = vunpack.c.l.bf16 %v512
      %v1522 = vunpack.c.l.bf16 %v513
      %v1523 = vunpack.c.l.bf16 %v514
      %v1524 = vunpack.c.l.bf16 %v515
      %v1525 = vld [vmem:[%s8] sm:$0x1]
      %v1527 = vlaneseq
      %v1528 = vshrl.u32 %v1527, 7
      %v1529 = vsub.s32 0, %v1528
      %v1530 = vrot.slane %v1525, %v1529
      %v1533 = vsel %vm1204, %v1500, 0
      %v1536 = vsel %vm1204, %v1501, 0
      %v1539 = vsel %vm1204, %v1502, 0
      %v1542 = vsel %vm1204, %v1503, 0
      %v1545 = vsel %vm1204, %v1504, 0
      %v1548 = vsel %vm1204, %v1505, 0
      %v1551 = vsel %vm1204, %v1506, 0
      %v1554 = vsel %vm1204, %v1507, 0
      %v1557 = vsel %vm1383, %v1508, 0
      %1559 = vmatprep.subr.bf16.mxu0 0
      %1560 = vmatpush1.bf16.msra.mxu0 0
      %1561 = vmatprep.subr.bf16.mxu0 0
      %1562 = vmatpush1.bf16.msra.mxu0 0
      %1563 = vmatprep.subr.bf16.mxu0 0
      %1564 = vmatpush1.bf16.msra.mxu0 0
      %1565 = vmatprep.subr.bf16.mxu0 0
      %1566 = vmatpush1.bf16.msra.mxu0 0
      %1567 = vmatprep.subr.bf16.mxu0 0
      %1568 = vmatpush1.bf16.msra.mxu0 0
      %1569 = vmatprep.subr.bf16.mxu0 0
      %1570 = vmatpush1.bf16.msra.mxu0 0
      %1571 = vmatprep.subr.bf16.mxu0 0
      %1572 = vmatpush1.bf16.msra.mxu0 0
      %1573 = vmatprep.subr.bf16.mxu0 0
      %1574 = vmatpush1.bf16.msra.mxu0 %v1557
      %1575 = vmatprep.subr.bf16.mxu0 0
      %1576 = vmatpush2.bf16.msra.mxu0 0
      %1577 = vmatprep.subr.bf16.mxu0 0
      %1578 = vmatpush2.bf16.msra.mxu0 0
      %1579 = vmatprep.subr.bf16.mxu0 0
      %1580 = vmatpush2.bf16.msra.mxu0 0
      %1581 = vmatprep.subr.bf16.mxu0 0
      %1582 = vmatpush2.bf16.msra.mxu0 0
      %1583 = vmatprep.subr.bf16.mxu0 0
      %1584 = vmatpush2.bf16.msra.mxu0 0
      %1585 = vmatprep.subr.bf16.mxu0 0
      %1586 = vmatpush2.bf16.msra.mxu0 0
      %1587 = vmatprep.subr.bf16.mxu0 0
      %1588 = vmatpush2.bf16.msra.mxu0 0
      %1589 = vmatprep.subr.bf16.mxu0 0
      %1590 = vmatpush2.bf16.msra.mxu0 0
      %1591 = vmatprep.mubr.bf16.mxu0 0
      %1592 = vmatmul.mubr.bf16.gmra.mxu0 %v1533
      %v1593 = vpop.f32.mrf.mxu0
      %v1594 = vadd.f32 %v1530, %v1593
      %v1595 = vpop.f32.mrf.mxu0
      %v1596 = vpop.f32.mrf.mxu0
      %v1597 = vadd.f32 %v1530, %v1596
      %v1598 = vpop.f32.mrf.mxu0
      %1599 = vmatprep.mubr.bf16.mxu0 0
      %1600 = vmatmul.mubr.bf16.gmra.mxu0 %v1536
      %v1601 = vpop.f32.mrf.mxu0
      %v1602 = vadd.f32 %v1530, %v1601
      %v1603 = vpop.f32.mrf.mxu0
      %v1604 = vpop.f32.mrf.mxu0
      %v1605 = vadd.f32 %v1530, %v1604
      %v1606 = vpop.f32.mrf.mxu0
      %1607 = vmatprep.mubr.bf16.mxu0 0
      %1608 = vmatmul.mubr.bf16.gmra.mxu0 %v1539
      %v1609 = vpop.f32.mrf.mxu0
      %v1610 = vadd.f32 %v1530, %v1609
      %v1611 = vpop.f32.mrf.mxu0
      %v1612 = vpop.f32.mrf.mxu0
      %v1613 = vadd.f32 %v1530, %v1612
      %v1614 = vpop.f32.mrf.mxu0
      %1615 = vmatprep.mubr.bf16.mxu0 0
      %1616 = vmatmul.mubr.bf16.gmra.mxu0 %v1542
      %v1617 = vpop.f32.mrf.mxu0
      %v1618 = vadd.f32 %v1530, %v1617
      %v1619 = vpop.f32.mrf.mxu0
      %v1620 = vpop.f32.mrf.mxu0
      %v1621 = vadd.f32 %v1530, %v1620
      %v1622 = vpop.f32.mrf.mxu0
      %1623 = vmatprep.mubr.bf16.mxu0 0
      %1624 = vmatmul.mubr.bf16.gmra.mxu0 %v1545
      %v1625 = vpop.f32.mrf.mxu0
      %v1626 = vadd.f32 %v1530, %v1625
      %v1627 = vpop.f32.mrf.mxu0
      %v1628 = vpop.f32.mrf.mxu0
      %v1629 = vadd.f32 %v1530, %v1628
      %v1630 = vpop.f32.mrf.mxu0
      %1631 = vmatprep.mubr.bf16.mxu0 0
      %1632 = vmatmul.mubr.bf16.gmra.mxu0 %v1548
      %v1633 = vpop.f32.mrf.mxu0
      %v1634 = vadd.f32 %v1530, %v1633
      %v1635 = vpop.f32.mrf.mxu0
      %v1636 = vpop.f32.mrf.mxu0
      %v1637 = vadd.f32 %v1530, %v1636
      %v1638 = vpop.f32.mrf.mxu0
      %1639 = vmatprep.mubr.bf16.mxu0 0
      %1640 = vmatmul.mubr.bf16.gmra.mxu0 %v1551
      %v1641 = vpop.f32.mrf.mxu0
      %v1642 = vadd.f32 %v1530, %v1641
      %v1643 = vpop.f32.mrf.mxu0
      %v1644 = vpop.f32.mrf.mxu0
      %v1645 = vadd.f32 %v1530, %v1644
      %v1646 = vpop.f32.mrf.mxu0
      %1647 = vmatprep.mubr.bf16.mxu0 0
      %1648 = vmatmul.mubr.bf16.gmra.mxu0 %v1554
      %v1649 = vpop.f32.mrf.mxu0
      %v1650 = vadd.f32 %v1530, %v1649
      %v1651 = vpop.f32.mrf.mxu0
      %v1652 = vpop.f32.mrf.mxu0
      %v1653 = vadd.f32 %v1530, %v1652
      %v1654 = vpop.f32.mrf.mxu0
      %1655 = vdwg.mxu0
      %v1656 = vadd.f32 %v1594, %v1509
      %v1657 = vadd.f32 %v1597, %v1510
      %v1658 = vadd.f32 %v1602, %v1511
      %v1659 = vadd.f32 %v1605, %v1512
      %v1660 = vadd.f32 %v1610, %v1513
      %v1661 = vadd.f32 %v1613, %v1514
      %v1662 = vadd.f32 %v1618, %v1515
      %v1663 = vadd.f32 %v1621, %v1516
      %v1664 = vadd.f32 %v1626, %v1517
      %v1665 = vadd.f32 %v1629, %v1518
      %v1666 = vadd.f32 %v1634, %v1519
      %v1667 = vadd.f32 %v1637, %v1520
      %v1668 = vadd.f32 %v1642, %v1521
      %v1669 = vadd.f32 %v1645, %v1522
      %v1670 = vadd.f32 %v1650, %v1523
      %v1671 = vadd.f32 %v1653, %v1524
      %v1672 = vmax.f32 %v1656, 0.0
      %v1673 = vmax.f32 %v1657, 0.0
      %v1674 = vmax.f32 %v1658, 0.0
      %v1675 = vmax.f32 %v1659, 0.0
      %v1676 = vmax.f32 %v1660, 0.0
      %v1677 = vmax.f32 %v1661, 0.0
      %v1678 = vmax.f32 %v1662, 0.0
      %v1679 = vmax.f32 %v1663, 0.0
      %v1680 = vmax.f32 %v1664, 0.0
      %v1681 = vmax.f32 %v1665, 0.0
      %v1682 = vmax.f32 %v1666, 0.0
      %v1683 = vmax.f32 %v1667, 0.0
      %v1684 = vmax.f32 %v1668, 0.0
      %v1685 = vmax.f32 %v1669, 0.0
      %v1686 = vmax.f32 %v1670, 0.0
      %v1687 = vmax.f32 %v1671, 0.0
      %v1688 = vpack.c.bf16 %v1673, %v1672
      %v1689 = vpack.c.bf16 %v1675, %v1674
      %v1690 = vpack.c.bf16 %v1677, %v1676
      %v1691 = vpack.c.bf16 %v1679, %v1678
      %v1692 = vpack.c.bf16 %v1681, %v1680
      %v1693 = vpack.c.bf16 %v1683, %v1682
      %v1694 = vpack.c.bf16 %v1685, %v1684
      %v1695 = vpack.c.bf16 %v1687, %v1686
      %v1704 = vunpack.c.l.b16 %v1688
      %v1705 = vunpack.c.h.b16 %v1688
      %v1706 = vunpack.c.l.b16 %v1689
      %v1707 = vunpack.c.h.b16 %v1689
      %v1708 = vunpack.c.l.b16 %v1690
      %v1709 = vunpack.c.h.b16 %v1690
      %v1710 = vunpack.c.l.b16 %v1691
      %v1711 = vunpack.c.h.b16 %v1691
      %v1712 = vunpack.c.l.b16 %v1692
      %v1713 = vunpack.c.h.b16 %v1692
      %v1714 = vunpack.c.l.b16 %v1693
      %v1715 = vunpack.c.h.b16 %v1693
      %v1716 = vunpack.c.l.b16 %v1694
      %v1717 = vunpack.c.h.b16 %v1694
      %v1718 = vunpack.c.l.b16 %v1695
      %v1719 = vunpack.c.h.b16 %v1695
      %v1720 = vpack.c.b16 %v1704, %v1704
      %v1721 = vpack.c.b16 %v1705, %v1705
      %v1722 = vpack.c.b16 %v1706, %v1706
      %v1723 = vpack.c.b16 %v1707, %v1707
      %v1724 = vpack.c.b16 %v1708, %v1708
      %v1725 = vpack.c.b16 %v1709, %v1709
      %v1726 = vpack.c.b16 %v1710, %v1710
      %v1727 = vpack.c.b16 %v1711, %v1711
      %v1728 = vpack.c.b16 %v1712, %v1712
      %v1729 = vpack.c.b16 %v1713, %v1713
      %v1730 = vpack.c.b16 %v1714, %v1714
      %v1731 = vpack.c.b16 %v1715, %v1715
      %v1732 = vpack.c.b16 %v1716, %v1716
      %v1733 = vpack.c.b16 %v1717, %v1717
      %v1734 = vpack.c.b16 %v1718, %v1718
      %v1735 = vpack.c.b16 %v1719, %v1719
      %vm1752 = vcmask 125952
      %1753 = vst.msk [vmem:[%s497] sm:$0xf] %vm1752, %v1720
      %1754 = vst.msk [vmem:[%s497 + $0x4] sm:$0xf] %vm1752, %v1721
      %1755 = vst.msk [vmem:[%s497 + $0x8] sm:$0xf] %vm1752, %v1722
      %1756 = vst.msk [vmem:[%s497 + $0xc] sm:$0xf] %vm1752, %v1723
      %1757 = vst.msk [vmem:[%s497 + $0x10] sm:$0xf] %vm1752, %v1724
      %1758 = vst.msk [vmem:[%s497 + $0x14] sm:$0xf] %vm1752, %v1725
      %1759 = vst.msk [vmem:[%s497 + $0x18] sm:$0xf] %vm1752, %v1726
      %1760 = vst.msk [vmem:[%s497 + $0x1c] sm:$0xf] %vm1752, %v1727
      %1761 = vst.msk [vmem:[%s497 + $0x20] sm:$0xf] %vm1752, %v1728
      %1762 = vst.msk [vmem:[%s497 + $0x24] sm:$0xf] %vm1752, %v1729
      %1763 = vst.msk [vmem:[%s497 + $0x28] sm:$0xf] %vm1752, %v1730
      %1764 = vst.msk [vmem:[%s497 + $0x2c] sm:$0xf] %vm1752, %v1731
      %1765 = vst.msk [vmem:[%s497 + $0x30] sm:$0xf] %vm1752, %v1732
      %1766 = vst.msk [vmem:[%s497 + $0x34] sm:$0xf] %vm1752, %v1733
      %1767 = vst.msk [vmem:[%s497 + $0x38] sm:$0xf] %vm1752, %v1734
      %1768 = vst.msk [vmem:[%s497 + $0x3c] sm:$0xf] %vm1752, %v1735
      %s1769 = smul.u32 16, %s25
      %p1770 = scmp.lt.s32.totalorder %s24, 1
      %s1771 = scalar_select %p1770, %s24, 1
      %p1772 = scmp.lt.s32.totalorder %s1769, 31
      %s1773 = scalar_select %p1772, %s1769, 31
      %s1774 = smul.addr %s1771, 32
      %s1775 = sadd.s32 %s1773, %s1774
      %s1776 = smul.addr %s1775, 4
      %s1777 = scalar_lea.vmem %s9, %s1776
      // Predicated region
      $region57: #{bottleneck_forward.1} parent=55 // pred_check
        %p1778 = pneg %p278
      $region58: #{bottleneck_forward.1} parent=55 // pred_check_branch
        %1780 = sbr.rel (%p1778) target = $region60
      $region59: #{bottleneck_forward.1} parent=55 // pred_region
        %s1781 = smul.u32 16, %s25
      $region60: #{bottleneck_forward.1} parent=55 // pred_fallthru
        _
    $region56: #{bottleneck_forward.1} parent=5 // pred_fallthru
      _
    %p1782 = scmp.le.s32.totalorder 2, %s15
    // Predicated region
    $region61: #{bottleneck_forward.1} parent=5 // pred_check
      %p1783 = pneg %p1782
    $region62: #{bottleneck_forward.1} parent=5 // pred_check_branch
      %1785 = sbr.rel (%p1783) target = $region64
    $region63: #{bottleneck_forward.1} parent=5 // pred_region
      %s1786 = ssub.s32 %s15, 2
      // Predicated region
      $region65: #{bottleneck_forward.1} parent=63 // pred_check
        %p1787 = pneg %p284
      $region66: #{bottleneck_forward.1} parent=63 // pred_check_branch
        %1789 = sbr.rel (%p1787) target = $region68
      $region67: #{bottleneck_forward.1} parent=63 // pred_region
        %s1790 = smul.u32 16, %s27
        %p1791 = scmp.lt.s32.totalorder %s26, 1
        %s1792 = scalar_select %p1791, %s26, 1
        %p1793 = scmp.lt.s32.totalorder %s1790, 31
        %s1794 = scalar_select %p1793, %s1790, 31
        %s1795 = smul.addr %s1792, 32
        %s1796 = sadd.s32 %s1794, %s1795
        %s1797 = smul.addr %s1796, 4
        %s1798 = scalar_lea.vmem %s9, %s1797
      $region68: #{bottleneck_forward.1} parent=63 // pred_fallthru
        _
    $region64: #{bottleneck_forward.1} parent=5 // pred_fallthru
      _
  $region6: #{bottleneck_forward.1} parent=0 // loop_footer
    %s19 = sadd.s32 1, %s15
  $region7: #{bottleneck_forward.1} parent=0 // loop_footer_branch
    %14 = sbr.rel target = $region3
  $region8: #{bottleneck_forward.1} parent=0 // loop_exit
    _

</llo_original>
